<compile_context>
chip_gen: v7x
topology: tpu7x:2x2x1
jax: 0.10.0
libtpu: 0.0.40
codegen_flags: <defaults>
</compile_context>

<pallas_src>
import functools

import jax
import jax.numpy as jnp
from jax.experimental import pallas as pl
from jax.experimental.pallas import tpu as pltpu


def _round_up(x, m):
    return ((x + m - 1) // m) * m


def _tile_bytes(shape, itemsize):
    """Rough VMEM footprint of a block (last dim -> lanes, 2nd-last -> sublanes)."""
    shape = (1,) * max(0, 2 - len(shape)) + tuple(int(d) for d in shape)
    *major, sub, lane = shape
    n_major = 1
    for d in major:
        n_major *= d
    sub_tile = 8 * (4 // itemsize)          # 8 sublanes for f32, 16 for bf16
    return n_major * _round_up(sub, sub_tile) * _round_up(lane, 128) * itemsize


def _pick_tile_rows(*, ho, wo, h, w, cin, k, f, kh, stride, padding, vmem_budget):
    """Largest TH (output rows per grid step) whose working set fits the budget."""
    wp = w + 2 * padding
    best = 1
    for th in range(1, ho + 1):
        ho_pad = pl.cdiv(ho, th) * th
        hp = max(h + 2 * padding, (ho_pad - 1) * stride + kh)
        need = (2 * _tile_bytes((hp, wp, cin), 2)        # padded image, dbl-buffered
                + 2 * _tile_bytes((th, wo, f), 2)        # bf16 out tile, dbl-buffered
                + _tile_bytes((k, f), 2)                 # weights (single-buffered)
                + 2 * _tile_bytes((1, f), 4)             # BN scale / shift
                + _tile_bytes((th * wo, k), 2)           # patch slab (bf16)
                + 2 * _tile_bytes((th * wo, f), 4))      # f32 matmul result + temps
        if th > 1 and need > vmem_budget:
            break
        best = th
        if th * wo >= 2048:                              # plenty of GEMM rows (M)
            break
    return best


def _conv_bn_relu_kernel(x_ref, w_ref, scale_ref, shift_ref, o_ref, *,
                         th, wo, kh, kw, stride):
    """One (TH, Wo) output-row tile of Conv2d + folded eval-BN + ReLU.

    x_ref:     (Hp, Wp, Cin)   bf16  whole padded image of this batch element
                                     (index map constant in the tile axis ->
                                     fetched from HBM once per image).
    w_ref:     (kh*kw*Cin, F)  bf16  im2col-ordered weights, Cout padded to F.
    scale_ref: (1, F)          f32   folded BN scale (zero in channel padding).
    shift_ref: (1, F)          f32   folded BN shift (incl. conv bias).
    o_ref:     (TH, Wo, F)     bf16  lane-dense output tile.
    """
    t = pl.program_id(1)
    cin = x_ref.shape[-1]
    f = o_ref.shape[-1]
    h0 = t * (th * stride)                 # first padded input row of this tile

    # Build the (TH*Wo, kh*kw*Cin) patch slab with kh*kw static slices so a
    # single MXU matmul covers the whole tile (M = TH*Wo, K = kh*kw*Cin)
    # instead of TH*kh*kw tiny (Wo, Cin) x (Cin, F) matmuls.
    pieces = []
    for i in range(kh):
        if stride == 1:
            rows = pl.ds(h0 + i, th)
        else:
            # TODO(synk): stride > 1 path uses strided ref slices and is not
            # exercised by the test; if Mosaic rejects it, pre-split W into
            # `stride` column phases in the wrapper and use plain slices here.
            rows = pl.ds(h0 + i, th, stride)
        for j in range(kw):
            cols = pl.ds(j, wo) if stride == 1 else pl.ds(j, wo, stride)
            pieces.append(x_ref[rows, cols, :])          # (TH, Wo, Cin)
    patch = jnp.concatenate(pieces, axis=-1)             # (TH, Wo, kh*kw*Cin)
    patch = patch.reshape(th * wo, kh * kw * cin)

    acc = jnp.dot(patch, w_ref[...], preferred_element_type=jnp.float32)

    y = acc * scale_ref[...] + shift_ref[...]            # folded BN, one broadcast
    y = jnp.maximum(y, 0.0)                              # ReLU
    o_ref[...] = y.reshape(th, wo, f).astype(o_ref.dtype)


def _const_block_spec(block_shape, index_map):
    """BlockSpec for a grid-invariant operand: single-buffered when supported."""
    buffered = getattr(pl, "Buffered", None)
    if buffered is not None:
        try:
            return pl.BlockSpec(block_shape, index_map,
                                pipeline_mode=buffered(1))
        except TypeError:                 # BlockSpec without pipeline_mode kwarg
            pass
    return pl.BlockSpec(block_shape, index_map)


def conv_block_forward_nhwc(x_nhwc, weight, bias, gamma, beta,
                            running_mean, running_var, *,
                            stride=1, padding=1, eps=1e-5):
    """Fused Conv2d + eval-BatchNorm + ReLU on NHWC input.

    x_nhwc: [N, H, W, Cin] (cast to bf16 internally).
    Returns [N, Ho, Wo, Cout] bf16 (chain-friendly: stack conv_blocks in NHWC
    to avoid per-call layout transposes).
    """
    N, H, W, Cin = x_nhwc.shape
    Cout, Cin_w, kh, kw = weight.shape
    assert Cin_w == Cin
    Ho = (H + 2 * padding - kh) // stride + 1
    Wo = (W + 2 * padding - kw) // stride + 1
    assert Ho > 0 and Wo > 0

    F = _round_up(Cout, 128)              # lane-dense padded Cout
    K = kh * kw * Cin                     # GEMM contraction depth
    Wp = W + 2 * padding

    # Per-generation VMEM budget (v7x: 64 MiB / TC, v5e & v6e: 128 MiB).
    try:
        vmem_cap = int(pltpu.get_tpu_info().vmem_capacity_bytes)
    except Exception:
        vmem_cap = 64 * 1024 * 1024
    vmem_budget = min(int(0.70 * vmem_cap), 96 * 1024 * 1024)

    TH = _pick_tile_rows(ho=Ho, wo=Wo, h=H, w=W, cin=Cin, k=K, f=F, kh=kh,
                         stride=stride, padding=padding,
                         vmem_budget=vmem_budget)
    n_tiles = pl.cdiv(Ho, TH)
    if N * n_tiles < 2 and Ho >= 2:       # keep both v7x TensorCores busy
        TH = pl.cdiv(Ho, 2)
        n_tiles = pl.cdiv(Ho, TH)
    Ho_pad = n_tiles * TH

    # Spatial zero-pad (+ extra bottom rows so the last row tile stays in
    # bounds; the corresponding output rows are sliced off below).
    Hp = max(H + 2 * padding, (Ho_pad - 1) * stride + kh)
    extra_h = Hp - (H + 2 * padding)
    xp = jnp.pad(x_nhwc.astype(jnp.bfloat16),
                 ((0, 0), (padding, padding + extra_h),
                  (padding, padding), (0, 0)))

    # Weights -> (kh*kw*Cin, F) bf16 in (i, j, ci) row order, Cout padded to F.
    w_p = jnp.transpose(weight, (2, 3, 1, 0)).astype(jnp.bfloat16)
    w_p = jnp.pad(w_p, ((0, 0), (0, 0), (0, 0), (0, F - Cout))).reshape(K, F)

    # Fold conv bias + eval-mode BatchNorm into per-channel scale/shift (f32).
    gamma32 = gamma.astype(jnp.float32)
    beta32 = beta.astype(jnp.float32)
    mean32 = running_mean.astype(jnp.float32)
    var32 = running_var.astype(jnp.float32)
    bias32 = bias.astype(jnp.float32)
    scale = gamma32 / jnp.sqrt(var32 + eps)
    shift = (bias32 - mean32) * scale + beta32
    scale_p = jnp.pad(scale, (0, F - Cout)).reshape(1, F)
    shift_p = jnp.pad(shift, (0, F - Cout)).reshape(1, F)

    flops = 2 * N * Ho_pad * Wo * K * F
    bytes_accessed = int(N * Hp * Wp * Cin * 2 + K * F * 2 + 2 * F * 4
                         + N * Ho_pad * Wo * F * 2)

    out_padded = pl.pallas_call(
        functools.partial(_conv_bn_relu_kernel,
                          th=TH, wo=Wo, kh=kh, kw=kw, stride=stride),
        out_shape=jax.ShapeDtypeStruct((N, Ho_pad, Wo, F), jnp.bfloat16),
        grid=(N, n_tiles),
        in_specs=[
            # Whole padded image per batch element; the index map is constant
            # in t, so the pipeline fetches it from HBM once per image (no
            # wrapper-side stacked copy, no halo duplication).
            pl.BlockSpec((None, Hp, Wp, Cin), lambda n, t: (n, 0, 0, 0)),
            # Grid-invariant operands: weights + folded BN affine.
            _const_block_spec((K, F), lambda n, t: (0, 0)),
            _const_block_spec((1, F), lambda n, t: (0, 0)),
            _const_block_spec((1, F), lambda n, t: (0, 0)),
        ],
        out_specs=pl.BlockSpec((None, TH, Wo, F), lambda n, t: (n, t, 0, 0)),
        compiler_params=pltpu.CompilerParams(
            dimension_semantics=("parallel", "parallel"),
            vmem_limit_bytes=int(min(0.75 * vmem_cap, 100 * 1024 * 1024)),
        ),
        cost_estimate=pl.CostEstimate(flops=flops, transcendentals=0,
                                      bytes_accessed=bytes_accessed),
    )(xp, w_p, scale_p, shift_p)

    # Drop padded rows / channels; output stays NHWC bf16.
    return out_padded[:, :Ho, :, :Cout]


def conv_block_forward(x, weight, bias, gamma, beta, running_mean, running_var,
                       *, stride=1, padding=1, eps=1e-5):
    """PyTorch conv_block forward. x: [N, Cin, H, W] -> [N, Cout, Ho, Wo] (x.dtype).

    For stacks of conv_blocks prefer conv_block_forward_nhwc to keep
    activations NHWC/bf16 and skip the per-call layout transposes.
    """
    x_nhwc = jnp.transpose(x, (0, 2, 3, 1))
    y = conv_block_forward_nhwc(x_nhwc, weight, bias, gamma, beta,
                                running_mean, running_var,
                                stride=stride, padding=padding, eps=eps)
    # The cast back to x.dtype fuses into the layout transpose on the XLA side.
    return jnp.transpose(y, (0, 3, 1, 2)).astype(x.dtype)


if __name__ == "__main__":
    # conv_block(in_channels=4, out_channels=8, kernel_size=3, stride=1,
    # padding=1) on a [2, 4, 16, 16] input, deterministic synthetic params.
    key = jax.random.PRNGKey(0)
    k_x, k_w, k_b, k_g, k_be, k_m, k_v = jax.random.split(key, 7)

    N, Cin, H, W = 2, 4, 16, 16
    Cout, kh, kw = 8, 3, 3

    x = jax.random.normal(k_x, (N, Cin, H, W), dtype=jnp.float32)
    weight = 0.1 * jax.random.normal(k_w, (Cout, Cin, kh, kw), dtype=jnp.float32)
    bias = 0.1 * jax.random.normal(k_b, (Cout,), dtype=jnp.float32)
    gamma = 1.0 + 0.05 * jax.random.normal(k_g, (Cout,), dtype=jnp.float32)
    beta = 0.05 * jax.random.normal(k_be, (Cout,), dtype=jnp.float32)
    running_mean = 0.1 * jax.random.normal(k_m, (Cout,), dtype=jnp.float32)
    running_var = 1.0 + 0.1 * jax.random.uniform(k_v, (Cout,), dtype=jnp.float32)

    fwd = jax.jit(functools.partial(conv_block_forward,
                                    stride=1, padding=1, eps=1e-5))
    out = jax.block_until_ready(
        fwd(x, weight, bias, gamma, beta, running_mean, running_var))

    assert out.shape == (N, Cout, H, W), out.shape
    assert bool(jnp.all(out >= 0.0))           # ReLU sanity

    # Pure-JAX f32 reference (eval-mode BN); bf16 operands/output -> loose tol.
    ref = jax.lax.conv_general_dilated(
        x, weight, window_strides=(1, 1), padding=((1, 1), (1, 1)),
        dimension_numbers=("NCHW", "OIHW", "NCHW"))
    ref = ref + bias.reshape(1, -1, 1, 1)
    ref = (ref - running_mean.reshape(1, -1, 1, 1)) / jnp.sqrt(
        running_var.reshape(1, -1, 1, 1) + 1e-5)
    ref = ref * gamma.reshape(1, -1, 1, 1) + beta.reshape(1, -1, 1, 1)
    ref = jnp.maximum(ref, 0.0)
    assert bool(jnp.allclose(out, ref, atol=5e-2, rtol=5e-2))

    print("KERNEL_OK")
</pallas_src>

<mosaic_0001>
module attributes {stable_mosaic.version = 11 : i64} {
  func.func @_conv_bn_relu_kernel(%arg0: i32, %arg1: i32, %arg2: memref<1x18x18x4xbf16, #tpu.memory_space<vmem>>, %arg3: memref<36x128xbf16, #tpu.memory_space<vmem>>, %arg4: memref<1x128xf32, #tpu.memory_space<vmem>>, %arg5: memref<1x128xf32, #tpu.memory_space<vmem>>, %arg6: memref<1x16x16x128xbf16, #tpu.memory_space<vmem>>) attributes {dimension_semantics = [#tpu.dimension_semantics<parallel>, #tpu.dimension_semantics<parallel>], iteration_bounds = array<i64: 2, 1>, scalar_prefetch = 0 : i64, scratch_operands = 0 : i64, tpu.core_type = #tpu.core_type<tc>, window_params = [{transform_indices = @transform_0, window_bounds = array<i64: 1, 18, 18, 4>}, {pipeline_mode = #tpu.pipeline_mode<synchronous>, transform_indices = @transform_1, window_bounds = array<i64: 36, 128>}, {pipeline_mode = #tpu.pipeline_mode<synchronous>, transform_indices = @transform_2, window_bounds = array<i64: 1, 128>}, {pipeline_mode = #tpu.pipeline_mode<synchronous>, transform_indices = @transform_3, window_bounds = array<i64: 1, 128>}, {transform_indices = @transform_4, window_bounds = array<i64: 1, 16, 16, 128>}]} {
    %c16_i32 = arith.constant 16 : i32
    %0 = arith.muli %arg1, %c16_i32 : i32
    %c0_i32 = arith.constant 0 : i32
    %1 = arith.addi %0, %c0_i32 : i32
    %c0 = arith.constant 0 : index
    %2 = arith.index_cast %1 : i32 to index
    %c0_0 = arith.constant 0 : index
    %c0_1 = arith.constant 0 : index
    %3 = vector.load %arg2[%c0, %2, %c0_0, %c0_1] : memref<1x18x18x4xbf16, #tpu.memory_space<vmem>>, vector<1x16x16x4xbf16>
    %4 = vector.shape_cast %3 : vector<1x16x16x4xbf16> to vector<16x16x4xbf16>
    %c0_2 = arith.constant 0 : index
    %5 = arith.index_cast %1 : i32 to index
    %c1 = arith.constant 1 : index
    %c0_3 = arith.constant 0 : index
    %6 = vector.load %arg2[%c0_2, %5, %c1, %c0_3] : memref<1x18x18x4xbf16, #tpu.memory_space<vmem>>, vector<1x16x16x4xbf16>
    %7 = vector.shape_cast %6 : vector<1x16x16x4xbf16> to vector<16x16x4xbf16>
    %c0_4 = arith.constant 0 : index
    %8 = arith.index_cast %1 : i32 to index
    %c2 = arith.constant 2 : index
    %c0_5 = arith.constant 0 : index
    %9 = vector.load %arg2[%c0_4, %8, %c2, %c0_5] : memref<1x18x18x4xbf16, #tpu.memory_space<vmem>>, vector<1x16x16x4xbf16>
    %10 = vector.shape_cast %9 : vector<1x16x16x4xbf16> to vector<16x16x4xbf16>
    %c1_i32 = arith.constant 1 : i32
    %11 = arith.addi %0, %c1_i32 : i32
    %c0_6 = arith.constant 0 : index
    %12 = arith.index_cast %11 : i32 to index
    %c0_7 = arith.constant 0 : index
    %c0_8 = arith.constant 0 : index
    %13 = vector.load %arg2[%c0_6, %12, %c0_7, %c0_8] : memref<1x18x18x4xbf16, #tpu.memory_space<vmem>>, vector<1x16x16x4xbf16>
    %14 = vector.shape_cast %13 : vector<1x16x16x4xbf16> to vector<16x16x4xbf16>
    %c0_9 = arith.constant 0 : index
    %15 = arith.index_cast %11 : i32 to index
    %c1_10 = arith.constant 1 : index
    %c0_11 = arith.constant 0 : index
    %16 = vector.load %arg2[%c0_9, %15, %c1_10, %c0_11] : memref<1x18x18x4xbf16, #tpu.memory_space<vmem>>, vector<1x16x16x4xbf16>
    %17 = vector.shape_cast %16 : vector<1x16x16x4xbf16> to vector<16x16x4xbf16>
    %c0_12 = arith.constant 0 : index
    %18 = arith.index_cast %11 : i32 to index
    %c2_13 = arith.constant 2 : index
    %c0_14 = arith.constant 0 : index
    %19 = vector.load %arg2[%c0_12, %18, %c2_13, %c0_14] : memref<1x18x18x4xbf16, #tpu.memory_space<vmem>>, vector<1x16x16x4xbf16>
    %20 = vector.shape_cast %19 : vector<1x16x16x4xbf16> to vector<16x16x4xbf16>
    %c2_i32 = arith.constant 2 : i32
    %21 = arith.addi %0, %c2_i32 : i32
    %c0_15 = arith.constant 0 : index
    %22 = arith.index_cast %21 : i32 to index
    %c0_16 = arith.constant 0 : index
    %c0_17 = arith.constant 0 : index
    %23 = vector.load %arg2[%c0_15, %22, %c0_16, %c0_17] : memref<1x18x18x4xbf16, #tpu.memory_space<vmem>>, vector<1x16x16x4xbf16>
    %24 = vector.shape_cast %23 : vector<1x16x16x4xbf16> to vector<16x16x4xbf16>
    %c0_18 = arith.constant 0 : index
    %25 = arith.index_cast %21 : i32 to index
    %c1_19 = arith.constant 1 : index
    %c0_20 = arith.constant 0 : index
    %26 = vector.load %arg2[%c0_18, %25, %c1_19, %c0_20] : memref<1x18x18x4xbf16, #tpu.memory_space<vmem>>, vector<1x16x16x4xbf16>
    %27 = vector.shape_cast %26 : vector<1x16x16x4xbf16> to vector<16x16x4xbf16>
    %c0_21 = arith.constant 0 : index
    %28 = arith.index_cast %21 : i32 to index
    %c2_22 = arith.constant 2 : index
    %c0_23 = arith.constant 0 : index
    %29 = vector.load %arg2[%c0_21, %28, %c2_22, %c0_23] : memref<1x18x18x4xbf16, #tpu.memory_space<vmem>>, vector<1x16x16x4xbf16>
    %30 = vector.shape_cast %29 : vector<1x16x16x4xbf16> to vector<16x16x4xbf16>
    %31 = tpu.concatenate %4, %7, %10, %14, %17, %20, %24, %27, %30 in 2 : vector<16x16x4xbf16>, vector<16x16x4xbf16>, vector<16x16x4xbf16>, vector<16x16x4xbf16>, vector<16x16x4xbf16>, vector<16x16x4xbf16>, vector<16x16x4xbf16>, vector<16x16x4xbf16>, vector<16x16x4xbf16> -> vector<16x16x36xbf16>
    %32 = vector.shape_cast %31 : vector<16x16x36xbf16> to vector<256x36xbf16>
    %c0_24 = arith.constant 0 : index
    %c0_25 = arith.constant 0 : index
    %33 = vector.load %arg3[%c0_24, %c0_25] : memref<36x128xbf16, #tpu.memory_space<vmem>>, vector<36x128xbf16>
    %cst = arith.constant dense<0.000000e+00> : vector<256x128xf32>
    %34 = tpu.matmul %32, %33, %cst {dimension_numbers = #tpu.dot_dimension_numbers<[1], [0], [0], [1], [0, 0, 1, 1], [], []>} : vector<256x36xbf16>, vector<36x128xbf16>, vector<256x128xf32> -> vector<256x128xf32>
    %c0_26 = arith.constant 0 : index
    %c0_27 = arith.constant 0 : index
    %35 = vector.load %arg4[%c0_26, %c0_27] : memref<1x128xf32, #tpu.memory_space<vmem>>, vector<1x128xf32>
    %36 = vector.broadcast %35 : vector<1x128xf32> to vector<256x128xf32>
    %37 = arith.mulf %34, %36 : vector<256x128xf32>
    %c0_28 = arith.constant 0 : index
    %c0_29 = arith.constant 0 : index
    %38 = vector.load %arg5[%c0_28, %c0_29] : memref<1x128xf32, #tpu.memory_space<vmem>>, vector<1x128xf32>
    %39 = vector.broadcast %38 : vector<1x128xf32> to vector<256x128xf32>
    %40 = arith.addf %37, %39 : vector<256x128xf32>
    %cst_30 = arith.constant 0.000000e+00 : f32
    %41 = vector.broadcast %cst_30 : f32 to vector<256x128xf32>
    %42 = arith.maximumf %40, %41 : vector<256x128xf32>
    %43 = vector.shape_cast %42 : vector<256x128xf32> to vector<16x16x128xf32>
    %44 = arith.truncf %43 : vector<16x16x128xf32> to vector<16x16x128xbf16>
    %c0_31 = arith.constant 0 : index
    %c0_32 = arith.constant 0 : index
    %c0_33 = arith.constant 0 : index
    %c0_34 = arith.constant 0 : index
    %45 = vector.load %arg6[%c0_31, %c0_32, %c0_33, %c0_34] : memref<1x16x16x128xbf16, #tpu.memory_space<vmem>>, vector<1x16x16x128xbf16>
    %46 = vector.shape_cast %45 : vector<1x16x16x128xbf16> to vector<16x16x128xbf16>
    %47 = vector.shape_cast %44 : vector<16x16x128xbf16> to vector<1x16x16x128xbf16>
    tpu.vector_store %arg6[%c0_31, %c0_32, %c0_33, %c0_34], %47 {strides = array<i32>} : memref<1x16x16x128xbf16, #tpu.memory_space<vmem>>, vector<1x16x16x128xbf16>,
    return
  }
  func.func @transform_0(%arg0: i32, %arg1: i32) -> (i32, i32, i32, i32) {
    %c0_i32 = arith.constant 0 : i32
    %c0_i32_0 = arith.constant 0 : i32
    %c0_i32_1 = arith.constant 0 : i32
    %c0_i32_2 = arith.constant 0 : i32
    return %arg0, %c0_i32, %c0_i32_0, %c0_i32_1 : i32, i32, i32, i32
  }
  func.func @transform_1(%arg0: i32, %arg1: i32) -> (i32, i32) {
    %c0_i32 = arith.constant 0 : i32
    %c0_i32_0 = arith.constant 0 : i32
    %c0_i32_1 = arith.constant 0 : i32
    return %c0_i32, %c0_i32_0 : i32, i32
  }
  func.func @transform_2(%arg0: i32, %arg1: i32) -> (i32, i32) {
    %c0_i32 = arith.constant 0 : i32
    %c0_i32_0 = arith.constant 0 : i32
    %c0_i32_1 = arith.constant 0 : i32
    return %c0_i32, %c0_i32_0 : i32, i32
  }
  func.func @transform_3(%arg0: i32, %arg1: i32) -> (i32, i32) {
    %c0_i32 = arith.constant 0 : i32
    %c0_i32_0 = arith.constant 0 : i32
    %c0_i32_1 = arith.constant 0 : i32
    return %c0_i32, %c0_i32_0 : i32, i32
  }
  func.func @transform_4(%arg0: i32, %arg1: i32) -> (i32, i32, i32, i32) {
    %c0_i32 = arith.constant 0 : i32
    %c0_i32_0 = arith.constant 0 : i32
    %c0_i32_1 = arith.constant 0 : i32
    return %arg0, %arg1, %c0_i32, %c0_i32_0 : i32, i32, i32, i32
  }
}

</mosaic_0001>

<llo_original>
// kernel: conv_block_forward.1
$region0: #{conv_block_forward.1}
  #allocation0 [shape = 'u32[]', space=smem, size = 0x4, offset = 0x4, fixed_abs, tag = 'smem constant byte address 0x4 - core index']
  #allocation1 [shape = 'u32[144,128]{1,0:T(1,128)}', space=vmem, size = 0x12000, scoped, tag = 'internal scratch']
  %s0 = inlined_call_operand.vmem [shape: bf16[2,18,18,4], index: 0, kind: input, shape index: {}]
  %s1 = inlined_call_operand.vmem [shape: bf16[36,128], index: 1, kind: input, shape index: {}]
  %s2 = inlined_call_operand.vmem [shape: f32[1,128], index: 2, kind: input, shape index: {}]
  %s3 = inlined_call_operand.vmem [shape: f32[1,128], index: 3, kind: input, shape index: {}]
  %s4 = inlined_call_operand.vmem [shape: bf16[2,16,16,128], index: 4, kind: output, shape index: {}]
  %s5 = sld [smem:[#allocation0]]
  $region49: #{conv_block_forward.1} parent=0
    _
  %s7 = ssub.s32 1, %s5
  %s8 = scalar_select 0, %s7, %s5
  loop: start=0, step=1, limit=4
  $region2: #{conv_block_forward.1} parent=0 // loop_pre_header
    _
  $region3: #{conv_block_forward.1} parent=0 // loop_header
    %s10 = sphi 0, %s14
    %p11 = scmp.ge.s32.totalorder %s10, 4
    %s17 = sphi 0, %s29
    %s18 = sphi 0, %s25
    %s19 = sphi 0, %s17
    %s20 = sphi 0, %s18
    %s21 = sphi 0, %s19
    %s22 = sphi 0, %s20
    %s32 = sphi 0, %s34
    %s35 = sphi 0, %s32
    %s36 = sphi 0, %s35
    %s52 = sphi 0, %s36
    %s56 = sphi 0, %s56
    %s58 = sphi 0, %s56
    %s59 = sphi 0, %s58
    %s73 = sphi 0, %s59
    %s77 = sphi 0, %s77
    %s79 = sphi 0, %s77
    %s80 = sphi 0, %s79
    %s94 = sphi 0, %s80
    %s98 = sphi 0, %s98
    %s100 = sphi 0, %s98
    %s101 = sphi 0, %s100
    %s115 = sphi 0, %s101
    %s123 = sphi 0, %s125
    %s126 = sphi 0, %s123
    %s127 = sphi 0, %s126
    %s143 = sphi 0, %s127
  $region4: #{conv_block_forward.1} parent=0 // loop_header_branch
    %13 = sbr.rel (%p11) target = $region8
  $region5: #{conv_block_forward.1} parent=0 // loop_body
    %s15 = ssub.s32 %s10, 1
    %s16 = ssub.s32 %s10, 2
    %s23 = sadd.s32 1, %s18
    %p24 = scmp.ge.s32.totalorder %s23, 1
    %s25 = scalar_select %p24, 0, %s23
    %s26 = sadd.s32 1, %s17
    %s27 = scalar_select %p24, %s26, %s17
    %p28 = scmp.ge.s32.totalorder %s27, 2
    %s29 = scalar_select %p28, 0, %s27
    %s30 = ssub.s32 %s17, %s29
    %p31 = scmp.eq.s32.totalorder %s30, 0
    %s33 = sadd.s32 %s32, 1
    %s34 = scalar_select %p31, %s32, %s33
    %p37 = pneg %p31
    %p38 = scmp.eq.s32.totalorder %s10, 1
    %p39 = por %p37, %p38
    %p40 = scmp.ne.s32.totalorder %s32, %s35
    %p41 = scmp.eq.s32.totalorder %s10, 0
    %p42 = por %p40, %p41
    %p43 = scmp.ne.s32.totalorder %s32, %s35
    %p44 = scmp.eq.s32.totalorder %s15, 1
    %p45 = por %p43, %p44
    %p46 = scmp.ne.s32.totalorder %s35, %s36
    %p47 = scmp.eq.s32.totalorder %s15, 0
    %p48 = por %p46, %p47
    %p49 = scmp.ne.s32.totalorder %s35, %s36
    %p50 = scmp.eq.s32.totalorder %s16, 1
    %p51 = por %p49, %p50
    %p53 = scmp.ne.s32.totalorder %s36, %s52
    %p54 = scmp.eq.s32.totalorder %s16, 0
    %p55 = por %p53, %p54
    %s57 = sadd.s32 %s56, 1
    %p60 = scmp.eq.s32.totalorder %s10, 1
    %p61 = scmp.ne.s32.totalorder %s56, %s58
    %p62 = scmp.eq.s32.totalorder %s10, 0
    %p63 = por %p61, %p62
    %p64 = scmp.ne.s32.totalorder %s56, %s58
    %p65 = scmp.eq.s32.totalorder %s15, 1
    %p66 = por %p64, %p65
    %p67 = scmp.ne.s32.totalorder %s58, %s59
    %p68 = scmp.eq.s32.totalorder %s15, 0
    %p69 = por %p67, %p68
    %p70 = scmp.ne.s32.totalorder %s58, %s59
    %p71 = scmp.eq.s32.totalorder %s16, 1
    %p72 = por %p70, %p71
    %p74 = scmp.ne.s32.totalorder %s59, %s73
    %p75 = scmp.eq.s32.totalorder %s16, 0
    %p76 = por %p74, %p75
    %s78 = sadd.s32 %s77, 1
    %p81 = scmp.eq.s32.totalorder %s10, 1
    %p82 = scmp.ne.s32.totalorder %s77, %s79
    %p83 = scmp.eq.s32.totalorder %s10, 0
    %p84 = por %p82, %p83
    %p85 = scmp.ne.s32.totalorder %s77, %s79
    %p86 = scmp.eq.s32.totalorder %s15, 1
    %p87 = por %p85, %p86
    %p88 = scmp.ne.s32.totalorder %s79, %s80
    %p89 = scmp.eq.s32.totalorder %s15, 0
    %p90 = por %p88, %p89
    %p91 = scmp.ne.s32.totalorder %s79, %s80
    %p92 = scmp.eq.s32.totalorder %s16, 1
    %p93 = por %p91, %p92
    %p95 = scmp.ne.s32.totalorder %s80, %s94
    %p96 = scmp.eq.s32.totalorder %s16, 0
    %p97 = por %p95, %p96
    %s99 = sadd.s32 %s98, 1
    %p102 = scmp.eq.s32.totalorder %s10, 1
    %p103 = scmp.ne.s32.totalorder %s98, %s100
    %p104 = scmp.eq.s32.totalorder %s10, 0
    %p105 = por %p103, %p104
    %p106 = scmp.ne.s32.totalorder %s98, %s100
    %p107 = scmp.eq.s32.totalorder %s15, 1
    %p108 = por %p106, %p107
    %p109 = scmp.ne.s32.totalorder %s100, %s101
    %p110 = scmp.eq.s32.totalorder %s15, 0
    %p111 = por %p109, %p110
    %p112 = scmp.ne.s32.totalorder %s100, %s101
    %p113 = scmp.eq.s32.totalorder %s16, 1
    %p114 = por %p112, %p113
    %p116 = scmp.ne.s32.totalorder %s101, %s115
    %p117 = scmp.eq.s32.totalorder %s16, 0
    %p118 = por %p116, %p117
    %s119 = ssub.s32 %s17, %s29
    %s120 = ssub.s32 %s18, %s25
    %s121 = sor.u32 %s119, %s120
    %p122 = scmp.eq.s32.totalorder %s121, 0
    %s124 = sadd.s32 %s123, 1
    %s125 = scalar_select %p122, %s123, %s124
    %p128 = pneg %p122
    %p129 = scmp.eq.s32.totalorder %s10, 1
    %p130 = por %p128, %p129
    %p131 = scmp.ne.s32.totalorder %s123, %s126
    %p132 = scmp.eq.s32.totalorder %s10, 0
    %p133 = por %p131, %p132
    %p134 = scmp.ne.s32.totalorder %s123, %s126
    %p135 = scmp.eq.s32.totalorder %s15, 1
    %p136 = por %p134, %p135
    %p137 = scmp.ne.s32.totalorder %s126, %s127
    %p138 = scmp.eq.s32.totalorder %s15, 0
    %p139 = por %p137, %p138
    %p140 = scmp.ne.s32.totalorder %s126, %s127
    %p141 = scmp.eq.s32.totalorder %s16, 1
    %p142 = por %p140, %p141
    %p144 = scmp.ne.s32.totalorder %s127, %s143
    %p145 = scmp.eq.s32.totalorder %s16, 0
    %p146 = por %p144, %p145
    %p147 = scmp.le.s32.totalorder 1, %s10
    %p148 = scmp.lt.s32.totalorder %s10, 3
    %p149 = pnand %p147, %p148
    %p150 = pneg %p149
    // Predicated region
    $region9: #{conv_block_forward.1} parent=5 // pred_check
      _
    $region10: #{conv_block_forward.1} parent=5 // pred_check_branch
      %152 = sbr.rel (%p149) target = $region12
    $region11: #{conv_block_forward.1} parent=5 // pred_region
      %s153 = ssub.s32 %s10, 1
      // Predicated region
      $region13: #{conv_block_forward.1} parent=11 // pred_check
        %p154 = pneg %p69
      $region14: #{conv_block_forward.1} parent=11 // pred_check_branch
        %156 = sbr.rel (%p154) target = $region16
      $region15: #{conv_block_forward.1} parent=11 // pred_region
        _
      $region16: #{conv_block_forward.1} parent=11 // pred_fallthru
        _
      // Predicated region
      $region17: #{conv_block_forward.1} parent=11 // pred_check
        %p157 = pneg %p90
      $region18: #{conv_block_forward.1} parent=11 // pred_check_branch
        %159 = sbr.rel (%p157) target = $region20
      $region19: #{conv_block_forward.1} parent=11 // pred_region
        _
      $region20: #{conv_block_forward.1} parent=11 // pred_fallthru
        _
      // Predicated region
      $region21: #{conv_block_forward.1} parent=11 // pred_check
        %p160 = pneg %p111
      $region22: #{conv_block_forward.1} parent=11 // pred_check_branch
        %162 = sbr.rel (%p160) target = $region24
      $region23: #{conv_block_forward.1} parent=11 // pred_region
        _
      $region24: #{conv_block_forward.1} parent=11 // pred_fallthru
        _
    $region12: #{conv_block_forward.1} parent=5 // pred_fallthru
      _
    %p163 = scmp.lt.s32.totalorder %s10, 2
    // Predicated region
    $region25: #{conv_block_forward.1} parent=5 // pred_check
      %p164 = pneg %p163
    $region26: #{conv_block_forward.1} parent=5 // pred_check_branch
      %166 = sbr.rel (%p164) target = $region28
    $region27: #{conv_block_forward.1} parent=5 // pred_region
      // Predicated region
      $region29: #{conv_block_forward.1} parent=27 // pred_check
        %p167 = pneg %p42
      $region30: #{conv_block_forward.1} parent=27 // pred_check_branch
        %169 = sbr.rel (%p167) target = $region32
      $region31: #{conv_block_forward.1} parent=27 // pred_region
        %p170 = scmp.lt.s32.totalorder %s17, 1
        %s171 = scalar_select %p170, %s17, 1
        %s172 = smul.addr %s171, 54
        %s173 = smul.addr %s172, 4
        %s174 = scalar_lea.vmem %s0, %s173
      $region32: #{conv_block_forward.1} parent=27 // pred_fallthru
        _
    $region28: #{conv_block_forward.1} parent=5 // pred_fallthru
      _
    %p175 = scmp.le.s32.totalorder 1, %s10
    %p176 = scmp.lt.s32.totalorder %s10, 3
    %p177 = pnand %p175, %p176
    %p178 = pneg %p177
    // Predicated region
    $region33: #{conv_block_forward.1} parent=5 // pred_check
      _
    $region34: #{conv_block_forward.1} parent=5 // pred_check_branch
      %180 = sbr.rel (%p177) target = $region36
    $region35: #{conv_block_forward.1} parent=5 // pred_region
      %s181 = ssub.s32 %s10, 1
      %p182 = scmp.lt.s32.totalorder %s19, 1
      %s183 = scalar_select %p182, %s19, 1
      %s184 = smul.addr %s183, 54
      %s185 = smul.addr %s184, 4
      %s186 = scalar_lea.vmem %s0, %s185
      %p187 = pneg %p48
      %p188 = pneg %p45
      %p189 = pneg %p69
      %p190 = pneg %p66
      %p191 = pneg %p90
      %p192 = pneg %p87
      %p193 = pneg %p111
      %p194 = pneg %p108
      %p195 = pneg %p139
      %p196 = pneg %p136
      %s197 = smul.u32 16, %s20
      %p198 = scmp.lt.s32.totalorder %s19, 1
      %s199 = scalar_select %p198, %s19, 1
      %p200 = scmp.lt.s32.totalorder %s197, 15
      %s201 = scalar_select %p200, %s197, 15
      %s202 = smul.addr %s201, 2
      %s203 = smul.addr %s199, 32
      %s204 = sadd.s32 %s202, %s203
      %s205 = smul.addr %s204, 4
      %s206 = scalar_lea.vmem %s4, %s205
      %p207 = scmp.lt.s32.totalorder %s19, 1
      %s208 = scalar_select %p207, %s19, 1
      %s209 = smul.addr %s208, 54
      %s210 = smul.addr %s209, 4
      %s211 = scalar_lea.vmem %s0, %s210
      %s212 = smul.u32 16, %s20
      %p213 = scmp.lt.s32.totalorder %s19, 1
      %s214 = scalar_select %p213, %s19, 1
      %p215 = scmp.lt.s32.totalorder %s212, 15
      %s216 = scalar_select %p215, %s212, 15
      %s217 = smul.addr %s216, 2
      %s218 = smul.addr %s214, 32
      %s219 = sadd.s32 %s217, %s218
      %s220 = smul.addr %s219, 4
      %s221 = scalar_lea.vmem %s4, %s220
      %s222 = smul.u32 16, %s20
      %s224 = smul.u32 %s20, 16
      %s225 = smul.u32 %s224, 3
      %s226 = smul.addr %s225, 4
      %s227 = scalar_lea.vmem %s211, %s226
      %v228 = vld [vmem:[%s227] sm:$0xf]
      %v229 = vld [vmem:[%s227 + $0x4] sm:$0xf]
      %v230 = vld [vmem:[%s227 + $0xc] sm:$0xf]
      %v231 = vld [vmem:[%s227 + $0x10] sm:$0xf]
      %v232 = vld [vmem:[%s227 + $0x18] sm:$0xf]
      %v233 = vld [vmem:[%s227 + $0x1c] sm:$0xf]
      %v234 = vld [vmem:[%s227 + $0x24] sm:$0xf]
      %v235 = vld [vmem:[%s227 + $0x28] sm:$0xf]
      %v236 = vld [vmem:[%s227 + $0x30] sm:$0xf]
      %v237 = vld [vmem:[%s227 + $0x34] sm:$0xf]
      %v238 = vld [vmem:[%s227 + $0x3c] sm:$0xf]
      %v239 = vld [vmem:[%s227 + $0x40] sm:$0xf]
      %v240 = vld [vmem:[%s227 + $0x48] sm:$0xf]
      %v241 = vld [vmem:[%s227 + $0x4c] sm:$0xf]
      %v242 = vld [vmem:[%s227 + $0x54] sm:$0xf]
      %v243 = vld [vmem:[%s227 + $0x58] sm:$0xf]
      %v244 = vld [vmem:[%s227 + $0x60] sm:$0xf]
      %v245 = vld [vmem:[%s227 + $0x64] sm:$0xf]
      %v246 = vld [vmem:[%s227 + $0x6c] sm:$0xf]
      %v247 = vld [vmem:[%s227 + $0x70] sm:$0xf]
      %v248 = vld [vmem:[%s227 + $0x78] sm:$0xf]
      %v249 = vld [vmem:[%s227 + $0x7c] sm:$0xf]
      %v250 = vld [vmem:[%s227 + $0x84] sm:$0xf]
      %v251 = vld [vmem:[%s227 + $0x88] sm:$0xf]
      %v252 = vld [vmem:[%s227 + $0x90] sm:$0xf]
      %v253 = vld [vmem:[%s227 + $0x94] sm:$0xf]
      %v254 = vld [vmem:[%s227 + $0x9c] sm:$0xf]
      %v255 = vld [vmem:[%s227 + $0xa0] sm:$0xf]
      %v256 = vld [vmem:[%s227 + $0xa8] sm:$0xf]
      %v257 = vld [vmem:[%s227 + $0xac] sm:$0xf]
      %v258 = vld [vmem:[%s227 + $0xb4] sm:$0xf]
      %v259 = vld [vmem:[%s227 + $0xb8] sm:$0xf]
      %v260 = vld [vmem:[%s227 + $0x8] sm:$0x1]
      %v261 = vld [vmem:[%s227 + $0x14] sm:$0x1]
      %v262 = vld [vmem:[%s227 + $0x20] sm:$0x1]
      %v263 = vld [vmem:[%s227 + $0x2c] sm:$0x1]
      %v264 = vld [vmem:[%s227 + $0x38] sm:$0x1]
      %v265 = vld [vmem:[%s227 + $0x44] sm:$0x1]
      %v266 = vld [vmem:[%s227 + $0x50] sm:$0x1]
      %v267 = vld [vmem:[%s227 + $0x5c] sm:$0x1]
      %v268 = vld [vmem:[%s227 + $0x68] sm:$0x1]
      %v269 = vld [vmem:[%s227 + $0x74] sm:$0x1]
      %v270 = vld [vmem:[%s227 + $0x80] sm:$0x1]
      %v271 = vld [vmem:[%s227 + $0x8c] sm:$0x1]
      %v272 = vld [vmem:[%s227 + $0x98] sm:$0x1]
      %v273 = vld [vmem:[%s227 + $0xa4] sm:$0x1]
      %v274 = vld [vmem:[%s227 + $0xb0] sm:$0x1]
      %v275 = vld [vmem:[%s227 + $0xbc] sm:$0x1]
      %v276 = vld [vmem:[%s227] sm:$0xe]
      %v277 = vld [vmem:[%s227 + $0xc] sm:$0xe]
      %v278 = vld [vmem:[%s227 + $0x18] sm:$0xe]
      %v279 = vld [vmem:[%s227 + $0x24] sm:$0xe]
      %v280 = vld [vmem:[%s227 + $0x30] sm:$0xe]
      %v281 = vld [vmem:[%s227 + $0x3c] sm:$0xe]
      %v282 = vld [vmem:[%s227 + $0x48] sm:$0xe]
      %v283 = vld [vmem:[%s227 + $0x54] sm:$0xe]
      %v284 = vld [vmem:[%s227 + $0x60] sm:$0xe]
      %v285 = vld [vmem:[%s227 + $0x6c] sm:$0xe]
      %v286 = vld [vmem:[%s227 + $0x78] sm:$0xe]
      %v287 = vld [vmem:[%s227 + $0x84] sm:$0xe]
      %v288 = vld [vmem:[%s227 + $0x90] sm:$0xe]
      %v289 = vld [vmem:[%s227 + $0x9c] sm:$0xe]
      %v290 = vld [vmem:[%s227 + $0xa8] sm:$0xe]
      %v291 = vld [vmem:[%s227 + $0xb4] sm:$0xe]
      %s292 = sadd.s32 %s224, 1
      %s293 = smul.u32 %s292, 3
      %s294 = smul.addr %s293, 4
      %s295 = scalar_lea.vmem %s211, %s294
      %v296 = vld [vmem:[%s295] sm:$0xf]
      %v297 = vld [vmem:[%s295 + $0x4] sm:$0xf]
      %v298 = vld [vmem:[%s295 + $0xc] sm:$0xf]
      %v299 = vld [vmem:[%s295 + $0x10] sm:$0xf]
      %v300 = vld [vmem:[%s295 + $0x18] sm:$0xf]
      %v301 = vld [vmem:[%s295 + $0x1c] sm:$0xf]
      %v302 = vld [vmem:[%s295 + $0x24] sm:$0xf]
      %v303 = vld [vmem:[%s295 + $0x28] sm:$0xf]
      %v304 = vld [vmem:[%s295 + $0x30] sm:$0xf]
      %v305 = vld [vmem:[%s295 + $0x34] sm:$0xf]
      %v306 = vld [vmem:[%s295 + $0x3c] sm:$0xf]
      %v307 = vld [vmem:[%s295 + $0x40] sm:$0xf]
      %v308 = vld [vmem:[%s295 + $0x48] sm:$0xf]
      %v309 = vld [vmem:[%s295 + $0x4c] sm:$0xf]
      %v310 = vld [vmem:[%s295 + $0x54] sm:$0xf]
      %v311 = vld [vmem:[%s295 + $0x58] sm:$0xf]
      %v312 = vld [vmem:[%s295 + $0x60] sm:$0xf]
      %v313 = vld [vmem:[%s295 + $0x64] sm:$0xf]
      %v314 = vld [vmem:[%s295 + $0x6c] sm:$0xf]
      %v315 = vld [vmem:[%s295 + $0x70] sm:$0xf]
      %v316 = vld [vmem:[%s295 + $0x78] sm:$0xf]
      %v317 = vld [vmem:[%s295 + $0x7c] sm:$0xf]
      %v318 = vld [vmem:[%s295 + $0x84] sm:$0xf]
      %v319 = vld [vmem:[%s295 + $0x88] sm:$0xf]
      %v320 = vld [vmem:[%s295 + $0x90] sm:$0xf]
      %v321 = vld [vmem:[%s295 + $0x94] sm:$0xf]
      %v322 = vld [vmem:[%s295 + $0x9c] sm:$0xf]
      %v323 = vld [vmem:[%s295 + $0xa0] sm:$0xf]
      %v324 = vld [vmem:[%s295 + $0xa8] sm:$0xf]
      %v325 = vld [vmem:[%s295 + $0xac] sm:$0xf]
      %v326 = vld [vmem:[%s295 + $0xb4] sm:$0xf]
      %v327 = vld [vmem:[%s295 + $0xb8] sm:$0xf]
      %v328 = vld [vmem:[%s295 + $0x8] sm:$0x1]
      %v329 = vld [vmem:[%s295 + $0x14] sm:$0x1]
      %v330 = vld [vmem:[%s295 + $0x20] sm:$0x1]
      %v331 = vld [vmem:[%s295 + $0x2c] sm:$0x1]
      %v332 = vld [vmem:[%s295 + $0x38] sm:$0x1]
      %v333 = vld [vmem:[%s295 + $0x44] sm:$0x1]
      %v334 = vld [vmem:[%s295 + $0x50] sm:$0x1]
      %v335 = vld [vmem:[%s295 + $0x5c] sm:$0x1]
      %v336 = vld [vmem:[%s295 + $0x68] sm:$0x1]
      %v337 = vld [vmem:[%s295 + $0x74] sm:$0x1]
      %v338 = vld [vmem:[%s295 + $0x80] sm:$0x1]
      %v339 = vld [vmem:[%s295 + $0x8c] sm:$0x1]
      %v340 = vld [vmem:[%s295 + $0x98] sm:$0x1]
      %v341 = vld [vmem:[%s295 + $0xa4] sm:$0x1]
      %v342 = vld [vmem:[%s295 + $0xb0] sm:$0x1]
      %v343 = vld [vmem:[%s295 + $0xbc] sm:$0x1]
      %v344 = vld [vmem:[%s295] sm:$0xe]
      %v345 = vld [vmem:[%s295 + $0xc] sm:$0xe]
      %v346 = vld [vmem:[%s295 + $0x18] sm:$0xe]
      %v347 = vld [vmem:[%s295 + $0x24] sm:$0xe]
      %v348 = vld [vmem:[%s295 + $0x30] sm:$0xe]
      %v349 = vld [vmem:[%s295 + $0x3c] sm:$0xe]
      %v350 = vld [vmem:[%s295 + $0x48] sm:$0xe]
      %v351 = vld [vmem:[%s295 + $0x54] sm:$0xe]
      %v352 = vld [vmem:[%s295 + $0x60] sm:$0xe]
      %v353 = vld [vmem:[%s295 + $0x6c] sm:$0xe]
      %v354 = vld [vmem:[%s295 + $0x78] sm:$0xe]
      %v355 = vld [vmem:[%s295 + $0x84] sm:$0xe]
      %v356 = vld [vmem:[%s295 + $0x90] sm:$0xe]
      %v357 = vld [vmem:[%s295 + $0x9c] sm:$0xe]
      %v358 = vld [vmem:[%s295 + $0xa8] sm:$0xe]
      %v359 = vld [vmem:[%s295 + $0xb4] sm:$0xe]
      %s360 = sadd.s32 %s224, 2
      %s361 = smul.u32 %s360, 3
      %s362 = smul.addr %s361, 4
      %s363 = scalar_lea.vmem %s211, %s362
      %v364 = vld [vmem:[%s363] sm:$0xf]
      %v365 = vld [vmem:[%s363 + $0x4] sm:$0xf]
      %v366 = vld [vmem:[%s363 + $0xc] sm:$0xf]
      %v367 = vld [vmem:[%s363 + $0x10] sm:$0xf]
      %v368 = vld [vmem:[%s363 + $0x18] sm:$0xf]
      %v369 = vld [vmem:[%s363 + $0x1c] sm:$0xf]
      %v370 = vld [vmem:[%s363 + $0x24] sm:$0xf]
      %v371 = vld [vmem:[%s363 + $0x28] sm:$0xf]
      %v372 = vld [vmem:[%s363 + $0x30] sm:$0xf]
      %v373 = vld [vmem:[%s363 + $0x34] sm:$0xf]
      %v374 = vld [vmem:[%s363 + $0x3c] sm:$0xf]
      %v375 = vld [vmem:[%s363 + $0x40] sm:$0xf]
      %v376 = vld [vmem:[%s363 + $0x48] sm:$0xf]
      %v377 = vld [vmem:[%s363 + $0x4c] sm:$0xf]
      %v378 = vld [vmem:[%s363 + $0x54] sm:$0xf]
      %v379 = vld [vmem:[%s363 + $0x58] sm:$0xf]
      %v380 = vld [vmem:[%s363 + $0x60] sm:$0xf]
      %v381 = vld [vmem:[%s363 + $0x64] sm:$0xf]
      %v382 = vld [vmem:[%s363 + $0x6c] sm:$0xf]
      %v383 = vld [vmem:[%s363 + $0x70] sm:$0xf]
      %v384 = vld [vmem:[%s363 + $0x78] sm:$0xf]
      %v385 = vld [vmem:[%s363 + $0x7c] sm:$0xf]
      %v386 = vld [vmem:[%s363 + $0x84] sm:$0xf]
      %v387 = vld [vmem:[%s363 + $0x88] sm:$0xf]
      %v388 = vld [vmem:[%s363 + $0x90] sm:$0xf]
      %v389 = vld [vmem:[%s363 + $0x94] sm:$0xf]
      %v390 = vld [vmem:[%s363 + $0x9c] sm:$0xf]
      %v391 = vld [vmem:[%s363 + $0xa0] sm:$0xf]
      %v392 = vld [vmem:[%s363 + $0xa8] sm:$0xf]
      %v393 = vld [vmem:[%s363 + $0xac] sm:$0xf]
      %v394 = vld [vmem:[%s363 + $0xb4] sm:$0xf]
      %v395 = vld [vmem:[%s363 + $0xb8] sm:$0xf]
      %v396 = vld [vmem:[%s363 + $0x8] sm:$0x1]
      %v397 = vld [vmem:[%s363 + $0x14] sm:$0x1]
      %v398 = vld [vmem:[%s363 + $0x20] sm:$0x1]
      %v399 = vld [vmem:[%s363 + $0x2c] sm:$0x1]
      %v400 = vld [vmem:[%s363 + $0x38] sm:$0x1]
      %v401 = vld [vmem:[%s363 + $0x44] sm:$0x1]
      %v402 = vld [vmem:[%s363 + $0x50] sm:$0x1]
      %v403 = vld [vmem:[%s363 + $0x5c] sm:$0x1]
      %v404 = vld [vmem:[%s363 + $0x68] sm:$0x1]
      %v405 = vld [vmem:[%s363 + $0x74] sm:$0x1]
      %v406 = vld [vmem:[%s363 + $0x80] sm:$0x1]
      %v407 = vld [vmem:[%s363 + $0x8c] sm:$0x1]
      %v408 = vld [vmem:[%s363 + $0x98] sm:$0x1]
      %v409 = vld [vmem:[%s363 + $0xa4] sm:$0x1]
      %v410 = vld [vmem:[%s363 + $0xb0] sm:$0x1]
      %v411 = vld [vmem:[%s363 + $0xbc] sm:$0x1]
      %v412 = vld [vmem:[%s363] sm:$0xe]
      %v413 = vld [vmem:[%s363 + $0xc] sm:$0xe]
      %v414 = vld [vmem:[%s363 + $0x18] sm:$0xe]
      %v415 = vld [vmem:[%s363 + $0x24] sm:$0xe]
      %v416 = vld [vmem:[%s363 + $0x30] sm:$0xe]
      %v417 = vld [vmem:[%s363 + $0x3c] sm:$0xe]
      %v418 = vld [vmem:[%s363 + $0x48] sm:$0xe]
      %v419 = vld [vmem:[%s363 + $0x54] sm:$0xe]
      %v420 = vld [vmem:[%s363 + $0x60] sm:$0xe]
      %v421 = vld [vmem:[%s363 + $0x6c] sm:$0xe]
      %v422 = vld [vmem:[%s363 + $0x78] sm:$0xe]
      %v423 = vld [vmem:[%s363 + $0x84] sm:$0xe]
      %v424 = vld [vmem:[%s363 + $0x90] sm:$0xe]
      %v425 = vld [vmem:[%s363 + $0x9c] sm:$0xe]
      %v426 = vld [vmem:[%s363 + $0xa8] sm:$0xe]
      %v427 = vld [vmem:[%s363 + $0xb4] sm:$0xe]
      %v460 = vunpack.c.l.b16 %v228
      %v461 = vunpack.c.l.b16 %v229
      %v462 = vunpack.c.l.b16 %v230
      %v463 = vunpack.c.l.b16 %v231
      %v464 = vunpack.c.l.b16 %v232
      %v465 = vunpack.c.l.b16 %v233
      %v466 = vunpack.c.l.b16 %v234
      %v467 = vunpack.c.l.b16 %v235
      %v468 = vunpack.c.l.b16 %v236
      %v469 = vunpack.c.l.b16 %v237
      %v470 = vunpack.c.l.b16 %v238
      %v471 = vunpack.c.l.b16 %v239
      %v472 = vunpack.c.l.b16 %v240
      %v473 = vunpack.c.l.b16 %v241
      %v474 = vunpack.c.l.b16 %v242
      %v475 = vunpack.c.l.b16 %v243
      %v476 = vunpack.c.l.b16 %v244
      %v477 = vunpack.c.l.b16 %v245
      %v478 = vunpack.c.l.b16 %v246
      %v479 = vunpack.c.l.b16 %v247
      %v480 = vunpack.c.l.b16 %v248
      %v481 = vunpack.c.l.b16 %v249
      %v482 = vunpack.c.l.b16 %v250
      %v483 = vunpack.c.l.b16 %v251
      %v484 = vunpack.c.l.b16 %v252
      %v485 = vunpack.c.l.b16 %v253
      %v486 = vunpack.c.l.b16 %v254
      %v487 = vunpack.c.l.b16 %v255
      %v488 = vunpack.c.l.b16 %v256
      %v489 = vunpack.c.l.b16 %v257
      %v490 = vunpack.c.l.b16 %v258
      %v491 = vunpack.c.l.b16 %v259
      %v492 = vpack.c.b16 %v461, %v460
      %v493 = vpack.c.b16 %v463, %v462
      %v494 = vpack.c.b16 %v465, %v464
      %v495 = vpack.c.b16 %v467, %v466
      %v496 = vpack.c.b16 %v469, %v468
      %v497 = vpack.c.b16 %v471, %v470
      %v498 = vpack.c.b16 %v473, %v472
      %v499 = vpack.c.b16 %v475, %v474
      %v500 = vpack.c.b16 %v477, %v476
      %v501 = vpack.c.b16 %v479, %v478
      %v502 = vpack.c.b16 %v481, %v480
      %v503 = vpack.c.b16 %v483, %v482
      %v504 = vpack.c.b16 %v485, %v484
      %v505 = vpack.c.b16 %v487, %v486
      %v506 = vpack.c.b16 %v489, %v488
      %v507 = vpack.c.b16 %v491, %v490
      %v524 = vunpack.c.l.b16 %v260
      %v525 = vunpack.c.l.b16 %v261
      %v526 = vunpack.c.l.b16 %v262
      %v527 = vunpack.c.l.b16 %v263
      %v528 = vunpack.c.l.b16 %v264
      %v529 = vunpack.c.l.b16 %v265
      %v530 = vunpack.c.l.b16 %v266
      %v531 = vunpack.c.l.b16 %v267
      %v532 = vunpack.c.l.b16 %v268
      %v533 = vunpack.c.l.b16 %v269
      %v534 = vunpack.c.l.b16 %v270
      %v535 = vunpack.c.l.b16 %v271
      %v536 = vunpack.c.l.b16 %v272
      %v537 = vunpack.c.l.b16 %v273
      %v538 = vunpack.c.l.b16 %v274
      %v539 = vunpack.c.l.b16 %v275
      %v540 = vpack.c.b16 %v524, %v524
      %v541 = vpack.c.b16 %v525, %v525
      %v542 = vpack.c.b16 %v526, %v526
      %v543 = vpack.c.b16 %v527, %v527
      %v544 = vpack.c.b16 %v528, %v528
      %v545 = vpack.c.b16 %v529, %v529
      %v546 = vpack.c.b16 %v530, %v530
      %v547 = vpack.c.b16 %v531, %v531
      %v548 = vpack.c.b16 %v532, %v532
      %v549 = vpack.c.b16 %v533, %v533
      %v550 = vpack.c.b16 %v534, %v534
      %v551 = vpack.c.b16 %v535, %v535
      %v552 = vpack.c.b16 %v536, %v536
      %v553 = vpack.c.b16 %v537, %v537
      %v554 = vpack.c.b16 %v538, %v538
      %v555 = vpack.c.b16 %v539, %v539
      %vm556 = vsmask.f32 7424
      %v558 = vshrl.u32 %v492, 16
      %v560 = vshll.u32 %v492, 16
      %v562 = vrot.slane %v560, 1
      %v563 = vor.u32 %v558, %v562
      %v565 = vshll.u32 %v540, 16
      %v567 = vrot.slane %v565, 1
      %v568 = vsel %vm556, %v563, %v567
      %v570 = vshrl.u32 %v493, 16
      %v572 = vshll.u32 %v493, 16
      %v574 = vrot.slane %v572, 1
      %v575 = vor.u32 %v570, %v574
      %v577 = vshll.u32 %v541, 16
      %v579 = vrot.slane %v577, 1
      %v580 = vsel %vm556, %v575, %v579
      %v582 = vshrl.u32 %v494, 16
      %v584 = vshll.u32 %v494, 16
      %v586 = vrot.slane %v584, 1
      %v587 = vor.u32 %v582, %v586
      %v589 = vshll.u32 %v542, 16
      %v591 = vrot.slane %v589, 1
      %v592 = vsel %vm556, %v587, %v591
      %v594 = vshrl.u32 %v495, 16
      %v596 = vshll.u32 %v495, 16
      %v598 = vrot.slane %v596, 1
      %v599 = vor.u32 %v594, %v598
      %v601 = vshll.u32 %v543, 16
      %v603 = vrot.slane %v601, 1
      %v604 = vsel %vm556, %v599, %v603
      %v606 = vshrl.u32 %v496, 16
      %v608 = vshll.u32 %v496, 16
      %v610 = vrot.slane %v608, 1
      %v611 = vor.u32 %v606, %v610
      %v613 = vshll.u32 %v544, 16
      %v615 = vrot.slane %v613, 1
      %v616 = vsel %vm556, %v611, %v615
      %v618 = vshrl.u32 %v497, 16
      %v620 = vshll.u32 %v497, 16
      %v622 = vrot.slane %v620, 1
      %v623 = vor.u32 %v618, %v622
      %v625 = vshll.u32 %v545, 16
      %v627 = vrot.slane %v625, 1
      %v628 = vsel %vm556, %v623, %v627
      %v630 = vshrl.u32 %v498, 16
      %v632 = vshll.u32 %v498, 16
      %v634 = vrot.slane %v632, 1
      %v635 = vor.u32 %v630, %v634
      %v637 = vshll.u32 %v546, 16
      %v639 = vrot.slane %v637, 1
      %v640 = vsel %vm556, %v635, %v639
      %v642 = vshrl.u32 %v499, 16
      %v644 = vshll.u32 %v499, 16
      %v646 = vrot.slane %v644, 1
      %v647 = vor.u32 %v642, %v646
      %v649 = vshll.u32 %v547, 16
      %v651 = vrot.slane %v649, 1
      %v652 = vsel %vm556, %v647, %v651
      %v654 = vshrl.u32 %v500, 16
      %v656 = vshll.u32 %v500, 16
      %v658 = vrot.slane %v656, 1
      %v659 = vor.u32 %v654, %v658
      %v661 = vshll.u32 %v548, 16
      %v663 = vrot.slane %v661, 1
      %v664 = vsel %vm556, %v659, %v663
      %v666 = vshrl.u32 %v501, 16
      %v668 = vshll.u32 %v501, 16
      %v670 = vrot.slane %v668, 1
      %v671 = vor.u32 %v666, %v670
      %v673 = vshll.u32 %v549, 16
      %v675 = vrot.slane %v673, 1
      %v676 = vsel %vm556, %v671, %v675
      %v678 = vshrl.u32 %v502, 16
      %v680 = vshll.u32 %v502, 16
      %v682 = vrot.slane %v680, 1
      %v683 = vor.u32 %v678, %v682
      %v685 = vshll.u32 %v550, 16
      %v687 = vrot.slane %v685, 1
      %v688 = vsel %vm556, %v683, %v687
      %v690 = vshrl.u32 %v503, 16
      %v692 = vshll.u32 %v503, 16
      %v694 = vrot.slane %v692, 1
      %v695 = vor.u32 %v690, %v694
      %v697 = vshll.u32 %v551, 16
      %v699 = vrot.slane %v697, 1
      %v700 = vsel %vm556, %v695, %v699
      %v702 = vshrl.u32 %v504, 16
      %v704 = vshll.u32 %v504, 16
      %v706 = vrot.slane %v704, 1
      %v707 = vor.u32 %v702, %v706
      %v709 = vshll.u32 %v552, 16
      %v711 = vrot.slane %v709, 1
      %v712 = vsel %vm556, %v707, %v711
      %v714 = vshrl.u32 %v505, 16
      %v716 = vshll.u32 %v505, 16
      %v718 = vrot.slane %v716, 1
      %v719 = vor.u32 %v714, %v718
      %v721 = vshll.u32 %v553, 16
      %v723 = vrot.slane %v721, 1
      %v724 = vsel %vm556, %v719, %v723
      %v726 = vshrl.u32 %v506, 16
      %v728 = vshll.u32 %v506, 16
      %v730 = vrot.slane %v728, 1
      %v731 = vor.u32 %v726, %v730
      %v733 = vshll.u32 %v554, 16
      %v735 = vrot.slane %v733, 1
      %v736 = vsel %vm556, %v731, %v735
      %v738 = vshrl.u32 %v507, 16
      %v740 = vshll.u32 %v507, 16
      %v742 = vrot.slane %v740, 1
      %v743 = vor.u32 %v738, %v742
      %v745 = vshll.u32 %v555, 16
      %v747 = vrot.slane %v745, 1
      %v748 = vsel %vm556, %v743, %v747
      %749 = vrot.lane.b32.xlu0 %v568, 4
      %v750 = vpop.permute.xlu0 %749
      %751 = vrot.lane.b32.xlu0 %v580, 4
      %v752 = vpop.permute.xlu0 %751
      %753 = vrot.lane.b32.xlu0 %v592, 4
      %v754 = vpop.permute.xlu0 %753
      %755 = vrot.lane.b32.xlu0 %v604, 4
      %v756 = vpop.permute.xlu0 %755
      %757 = vrot.lane.b32.xlu0 %v616, 4
      %v758 = vpop.permute.xlu0 %757
      %759 = vrot.lane.b32.xlu0 %v628, 4
      %v760 = vpop.permute.xlu0 %759
      %761 = vrot.lane.b32.xlu0 %v640, 4
      %v762 = vpop.permute.xlu0 %761
      %763 = vrot.lane.b32.xlu0 %v652, 4
      %v764 = vpop.permute.xlu0 %763
      %765 = vrot.lane.b32.xlu0 %v664, 4
      %v766 = vpop.permute.xlu0 %765
      %767 = vrot.lane.b32.xlu0 %v676, 4
      %v768 = vpop.permute.xlu0 %767
      %769 = vrot.lane.b32.xlu0 %v688, 4
      %v770 = vpop.permute.xlu0 %769
      %771 = vrot.lane.b32.xlu0 %v700, 4
      %v772 = vpop.permute.xlu0 %771
      %773 = vrot.lane.b32.xlu0 %v712, 4
      %v774 = vpop.permute.xlu0 %773
      %775 = vrot.lane.b32.xlu0 %v724, 4
      %v776 = vpop.permute.xlu0 %775
      %777 = vrot.lane.b32.xlu0 %v736, 4
      %v778 = vpop.permute.xlu0 %777
      %779 = vrot.lane.b32.xlu0 %v748, 4
      %v780 = vpop.permute.xlu0 %779
      %v797 = vunpack.c.l.b16 %v276
      %v798 = vunpack.c.l.b16 %v277
      %v799 = vunpack.c.l.b16 %v278
      %v800 = vunpack.c.l.b16 %v279
      %v801 = vunpack.c.l.b16 %v280
      %v802 = vunpack.c.l.b16 %v281
      %v803 = vunpack.c.l.b16 %v282
      %v804 = vunpack.c.l.b16 %v283
      %v805 = vunpack.c.l.b16 %v284
      %v806 = vunpack.c.l.b16 %v285
      %v807 = vunpack.c.l.b16 %v286
      %v808 = vunpack.c.l.b16 %v287
      %v809 = vunpack.c.l.b16 %v288
      %v810 = vunpack.c.l.b16 %v289
      %v811 = vunpack.c.l.b16 %v290
      %v812 = vunpack.c.l.b16 %v291
      %v813 = vpack.c.b16 %v461, %v797
      %v814 = vpack.c.b16 %v463, %v798
      %v815 = vpack.c.b16 %v465, %v799
      %v816 = vpack.c.b16 %v467, %v800
      %v817 = vpack.c.b16 %v469, %v801
      %v818 = vpack.c.b16 %v471, %v802
      %v819 = vpack.c.b16 %v473, %v803
      %v820 = vpack.c.b16 %v475, %v804
      %v821 = vpack.c.b16 %v477, %v805
      %v822 = vpack.c.b16 %v479, %v806
      %v823 = vpack.c.b16 %v481, %v807
      %v824 = vpack.c.b16 %v483, %v808
      %v825 = vpack.c.b16 %v485, %v809
      %v826 = vpack.c.b16 %v487, %v810
      %v827 = vpack.c.b16 %v489, %v811
      %v828 = vpack.c.b16 %v491, %v812
      %vm829 = vcmask 1046528
      %v830 = vrot.slane %v813, 1
      %v831 = vrot.slane %v540, 1
      %v832 = vsel %vm829, %v830, %v831
      %v833 = vrot.slane %v814, 1
      %v834 = vrot.slane %v541, 1
      %v835 = vsel %vm829, %v833, %v834
      %v836 = vrot.slane %v815, 1
      %v837 = vrot.slane %v542, 1
      %v838 = vsel %vm829, %v836, %v837
      %v839 = vrot.slane %v816, 1
      %v840 = vrot.slane %v543, 1
      %v841 = vsel %vm829, %v839, %v840
      %v842 = vrot.slane %v817, 1
      %v843 = vrot.slane %v544, 1
      %v844 = vsel %vm829, %v842, %v843
      %v845 = vrot.slane %v818, 1
      %v846 = vrot.slane %v545, 1
      %v847 = vsel %vm829, %v845, %v846
      %v848 = vrot.slane %v819, 1
      %v849 = vrot.slane %v546, 1
      %v850 = vsel %vm829, %v848, %v849
      %v851 = vrot.slane %v820, 1
      %v852 = vrot.slane %v547, 1
      %v853 = vsel %vm829, %v851, %v852
      %v854 = vrot.slane %v821, 1
      %v855 = vrot.slane %v548, 1
      %v856 = vsel %vm829, %v854, %v855
      %v857 = vrot.slane %v822, 1
      %v858 = vrot.slane %v549, 1
      %v859 = vsel %vm829, %v857, %v858
      %v860 = vrot.slane %v823, 1
      %v861 = vrot.slane %v550, 1
      %v862 = vsel %vm829, %v860, %v861
      %v863 = vrot.slane %v824, 1
      %v864 = vrot.slane %v551, 1
      %v865 = vsel %vm829, %v863, %v864
      %v866 = vrot.slane %v825, 1
      %v867 = vrot.slane %v552, 1
      %v868 = vsel %vm829, %v866, %v867
      %v869 = vrot.slane %v826, 1
      %v870 = vrot.slane %v553, 1
      %v871 = vsel %vm829, %v869, %v870
      %v872 = vrot.slane %v827, 1
      %v873 = vrot.slane %v554, 1
      %v874 = vsel %vm829, %v872, %v873
      %v875 = vrot.slane %v828, 1
      %v876 = vrot.slane %v555, 1
      %v877 = vsel %vm829, %v875, %v876
      %878 = vrot.lane.b32.xlu0 %v832, 8
      %v879 = vpop.permute.xlu0 %878
      %880 = vrot.lane.b32.xlu0 %v835, 8
      %v881 = vpop.permute.xlu0 %880
      %882 = vrot.lane.b32.xlu0 %v838, 8
      %v883 = vpop.permute.xlu0 %882
      %884 = vrot.lane.b32.xlu0 %v841, 8
      %v885 = vpop.permute.xlu0 %884
      %886 = vrot.lane.b32.xlu0 %v844, 8
      %v887 = vpop.permute.xlu0 %886
      %888 = vrot.lane.b32.xlu0 %v847, 8
      %v889 = vpop.permute.xlu0 %888
      %890 = vrot.lane.b32.xlu0 %v850, 8
      %v891 = vpop.permute.xlu0 %890
      %892 = vrot.lane.b32.xlu0 %v853, 8
      %v893 = vpop.permute.xlu0 %892
      %894 = vrot.lane.b32.xlu0 %v856, 8
      %v895 = vpop.permute.xlu0 %894
      %896 = vrot.lane.b32.xlu0 %v859, 8
      %v897 = vpop.permute.xlu0 %896
      %898 = vrot.lane.b32.xlu0 %v862, 8
      %v899 = vpop.permute.xlu0 %898
      %900 = vrot.lane.b32.xlu0 %v865, 8
      %v901 = vpop.permute.xlu0 %900
      %902 = vrot.lane.b32.xlu0 %v868, 8
      %v903 = vpop.permute.xlu0 %902
      %904 = vrot.lane.b32.xlu0 %v871, 8
      %v905 = vpop.permute.xlu0 %904
      %906 = vrot.lane.b32.xlu0 %v874, 8
      %v907 = vpop.permute.xlu0 %906
      %908 = vrot.lane.b32.xlu0 %v877, 8
      %v909 = vpop.permute.xlu0 %908
      %v942 = vunpack.c.l.b16 %v296
      %v943 = vunpack.c.l.b16 %v297
      %v944 = vunpack.c.l.b16 %v298
      %v945 = vunpack.c.l.b16 %v299
      %v946 = vunpack.c.l.b16 %v300
      %v947 = vunpack.c.l.b16 %v301
      %v948 = vunpack.c.l.b16 %v302
      %v949 = vunpack.c.l.b16 %v303
      %v950 = vunpack.c.l.b16 %v304
      %v951 = vunpack.c.l.b16 %v305
      %v952 = vunpack.c.l.b16 %v306
      %v953 = vunpack.c.l.b16 %v307
      %v954 = vunpack.c.l.b16 %v308
      %v955 = vunpack.c.l.b16 %v309
      %v956 = vunpack.c.l.b16 %v310
      %v957 = vunpack.c.l.b16 %v311
      %v958 = vunpack.c.l.b16 %v312
      %v959 = vunpack.c.l.b16 %v313
      %v960 = vunpack.c.l.b16 %v314
      %v961 = vunpack.c.l.b16 %v315
      %v962 = vunpack.c.l.b16 %v316
      %v963 = vunpack.c.l.b16 %v317
      %v964 = vunpack.c.l.b16 %v318
      %v965 = vunpack.c.l.b16 %v319
      %v966 = vunpack.c.l.b16 %v320
      %v967 = vunpack.c.l.b16 %v321
      %v968 = vunpack.c.l.b16 %v322
      %v969 = vunpack.c.l.b16 %v323
      %v970 = vunpack.c.l.b16 %v324
      %v971 = vunpack.c.l.b16 %v325
      %v972 = vunpack.c.l.b16 %v326
      %v973 = vunpack.c.l.b16 %v327
      %v974 = vpack.c.b16 %v943, %v942
      %v975 = vpack.c.b16 %v945, %v944
      %v976 = vpack.c.b16 %v947, %v946
      %v977 = vpack.c.b16 %v949, %v948
      %v978 = vpack.c.b16 %v951, %v950
      %v979 = vpack.c.b16 %v953, %v952
      %v980 = vpack.c.b16 %v955, %v954
      %v981 = vpack.c.b16 %v957, %v956
      %v982 = vpack.c.b16 %v959, %v958
      %v983 = vpack.c.b16 %v961, %v960
      %v984 = vpack.c.b16 %v963, %v962
      %v985 = vpack.c.b16 %v965, %v964
      %v986 = vpack.c.b16 %v967, %v966
      %v987 = vpack.c.b16 %v969, %v968
      %v988 = vpack.c.b16 %v971, %v970
      %v989 = vpack.c.b16 %v973, %v972
      %990 = vrot.lane.b32.xlu0 %v974, 12
      %v991 = vpop.permute.xlu0 %990
      %992 = vrot.lane.b32.xlu0 %v975, 12
      %v993 = vpop.permute.xlu0 %992
      %994 = vrot.lane.b32.xlu0 %v976, 12
      %v995 = vpop.permute.xlu0 %994
      %996 = vrot.lane.b32.xlu0 %v977, 12
      %v997 = vpop.permute.xlu0 %996
      %998 = vrot.lane.b32.xlu0 %v978, 12
      %v999 = vpop.permute.xlu0 %998
      %1000 = vrot.lane.b32.xlu0 %v979, 12
      %v1001 = vpop.permute.xlu0 %1000
      %1002 = vrot.lane.b32.xlu0 %v980, 12
      %v1003 = vpop.permute.xlu0 %1002
      %1004 = vrot.lane.b32.xlu0 %v981, 12
      %v1005 = vpop.permute.xlu0 %1004
      %1006 = vrot.lane.b32.xlu0 %v982, 12
      %v1007 = vpop.permute.xlu0 %1006
      %1008 = vrot.lane.b32.xlu0 %v983, 12
      %v1009 = vpop.permute.xlu0 %1008
      %1010 = vrot.lane.b32.xlu0 %v984, 12
      %v1011 = vpop.permute.xlu0 %1010
      %1012 = vrot.lane.b32.xlu0 %v985, 12
      %v1013 = vpop.permute.xlu0 %1012
      %1014 = vrot.lane.b32.xlu0 %v986, 12
      %v1015 = vpop.permute.xlu0 %1014
      %1016 = vrot.lane.b32.xlu0 %v987, 12
      %v1017 = vpop.permute.xlu0 %1016
      %1018 = vrot.lane.b32.xlu0 %v988, 12
      %v1019 = vpop.permute.xlu0 %1018
      %1020 = vrot.lane.b32.xlu0 %v989, 12
      %v1021 = vpop.permute.xlu0 %1020
      %v1038 = vunpack.c.l.b16 %v328
      %v1039 = vunpack.c.l.b16 %v329
      %v1040 = vunpack.c.l.b16 %v330
      %v1041 = vunpack.c.l.b16 %v331
      %v1042 = vunpack.c.l.b16 %v332
      %v1043 = vunpack.c.l.b16 %v333
      %v1044 = vunpack.c.l.b16 %v334
      %v1045 = vunpack.c.l.b16 %v335
      %v1046 = vunpack.c.l.b16 %v336
      %v1047 = vunpack.c.l.b16 %v337
      %v1048 = vunpack.c.l.b16 %v338
      %v1049 = vunpack.c.l.b16 %v339
      %v1050 = vunpack.c.l.b16 %v340
      %v1051 = vunpack.c.l.b16 %v341
      %v1052 = vunpack.c.l.b16 %v342
      %v1053 = vunpack.c.l.b16 %v343
      %v1054 = vpack.c.b16 %v1038, %v1038
      %v1055 = vpack.c.b16 %v1039, %v1039
      %v1056 = vpack.c.b16 %v1040, %v1040
      %v1057 = vpack.c.b16 %v1041, %v1041
      %v1058 = vpack.c.b16 %v1042, %v1042
      %v1059 = vpack.c.b16 %v1043, %v1043
      %v1060 = vpack.c.b16 %v1044, %v1044
      %v1061 = vpack.c.b16 %v1045, %v1045
      %v1062 = vpack.c.b16 %v1046, %v1046
      %v1063 = vpack.c.b16 %v1047, %v1047
      %v1064 = vpack.c.b16 %v1048, %v1048
      %v1065 = vpack.c.b16 %v1049, %v1049
      %v1066 = vpack.c.b16 %v1050, %v1050
      %v1067 = vpack.c.b16 %v1051, %v1051
      %v1068 = vpack.c.b16 %v1052, %v1052
      %v1069 = vpack.c.b16 %v1053, %v1053
      %v1071 = vshrl.u32 %v974, 16
      %v1073 = vshll.u32 %v974, 16
      %v1075 = vrot.slane %v1073, 1
      %v1076 = vor.u32 %v1071, %v1075
      %v1078 = vshll.u32 %v1054, 16
      %v1080 = vrot.slane %v1078, 1
      %v1081 = vsel %vm556, %v1076, %v1080
      %v1083 = vshrl.u32 %v975, 16
      %v1085 = vshll.u32 %v975, 16
      %v1087 = vrot.slane %v1085, 1
      %v1088 = vor.u32 %v1083, %v1087
      %v1090 = vshll.u32 %v1055, 16
      %v1092 = vrot.slane %v1090, 1
      %v1093 = vsel %vm556, %v1088, %v1092
      %v1095 = vshrl.u32 %v976, 16
      %v1097 = vshll.u32 %v976, 16
      %v1099 = vrot.slane %v1097, 1
      %v1100 = vor.u32 %v1095, %v1099
      %v1102 = vshll.u32 %v1056, 16
      %v1104 = vrot.slane %v1102, 1
      %v1105 = vsel %vm556, %v1100, %v1104
      %v1107 = vshrl.u32 %v977, 16
      %v1109 = vshll.u32 %v977, 16
      %v1111 = vrot.slane %v1109, 1
      %v1112 = vor.u32 %v1107, %v1111
      %v1114 = vshll.u32 %v1057, 16
      %v1116 = vrot.slane %v1114, 1
      %v1117 = vsel %vm556, %v1112, %v1116
      %v1119 = vshrl.u32 %v978, 16
      %v1121 = vshll.u32 %v978, 16
      %v1123 = vrot.slane %v1121, 1
      %v1124 = vor.u32 %v1119, %v1123
      %v1126 = vshll.u32 %v1058, 16
      %v1128 = vrot.slane %v1126, 1
      %v1129 = vsel %vm556, %v1124, %v1128
      %v1131 = vshrl.u32 %v979, 16
      %v1133 = vshll.u32 %v979, 16
      %v1135 = vrot.slane %v1133, 1
      %v1136 = vor.u32 %v1131, %v1135
      %v1138 = vshll.u32 %v1059, 16
      %v1140 = vrot.slane %v1138, 1
      %v1141 = vsel %vm556, %v1136, %v1140
      %v1143 = vshrl.u32 %v980, 16
      %v1145 = vshll.u32 %v980, 16
      %v1147 = vrot.slane %v1145, 1
      %v1148 = vor.u32 %v1143, %v1147
      %v1150 = vshll.u32 %v1060, 16
      %v1152 = vrot.slane %v1150, 1
      %v1153 = vsel %vm556, %v1148, %v1152
      %v1155 = vshrl.u32 %v981, 16
      %v1157 = vshll.u32 %v981, 16
      %v1159 = vrot.slane %v1157, 1
      %v1160 = vor.u32 %v1155, %v1159
      %v1162 = vshll.u32 %v1061, 16
      %v1164 = vrot.slane %v1162, 1
      %v1165 = vsel %vm556, %v1160, %v1164
      %v1167 = vshrl.u32 %v982, 16
      %v1169 = vshll.u32 %v982, 16
      %v1171 = vrot.slane %v1169, 1
      %v1172 = vor.u32 %v1167, %v1171
      %v1174 = vshll.u32 %v1062, 16
      %v1176 = vrot.slane %v1174, 1
      %v1177 = vsel %vm556, %v1172, %v1176
      %v1179 = vshrl.u32 %v983, 16
      %v1181 = vshll.u32 %v983, 16
      %v1183 = vrot.slane %v1181, 1
      %v1184 = vor.u32 %v1179, %v1183
      %v1186 = vshll.u32 %v1063, 16
      %v1188 = vrot.slane %v1186, 1
      %v1189 = vsel %vm556, %v1184, %v1188
      %v1191 = vshrl.u32 %v984, 16
      %v1193 = vshll.u32 %v984, 16
      %v1195 = vrot.slane %v1193, 1
      %v1196 = vor.u32 %v1191, %v1195
      %v1198 = vshll.u32 %v1064, 16
      %v1200 = vrot.slane %v1198, 1
      %v1201 = vsel %vm556, %v1196, %v1200
      %v1203 = vshrl.u32 %v985, 16
      %v1205 = vshll.u32 %v985, 16
      %v1207 = vrot.slane %v1205, 1
      %v1208 = vor.u32 %v1203, %v1207
      %v1210 = vshll.u32 %v1065, 16
      %v1212 = vrot.slane %v1210, 1
      %v1213 = vsel %vm556, %v1208, %v1212
      %v1215 = vshrl.u32 %v986, 16
      %v1217 = vshll.u32 %v986, 16
      %v1219 = vrot.slane %v1217, 1
      %v1220 = vor.u32 %v1215, %v1219
      %v1222 = vshll.u32 %v1066, 16
      %v1224 = vrot.slane %v1222, 1
      %v1225 = vsel %vm556, %v1220, %v1224
      %v1227 = vshrl.u32 %v987, 16
      %v1229 = vshll.u32 %v987, 16
      %v1231 = vrot.slane %v1229, 1
      %v1232 = vor.u32 %v1227, %v1231
      %v1234 = vshll.u32 %v1067, 16
      %v1236 = vrot.slane %v1234, 1
      %v1237 = vsel %vm556, %v1232, %v1236
      %v1239 = vshrl.u32 %v988, 16
      %v1241 = vshll.u32 %v988, 16
      %v1243 = vrot.slane %v1241, 1
      %v1244 = vor.u32 %v1239, %v1243
      %v1246 = vshll.u32 %v1068, 16
      %v1248 = vrot.slane %v1246, 1
      %v1249 = vsel %vm556, %v1244, %v1248
      %v1251 = vshrl.u32 %v989, 16
      %v1253 = vshll.u32 %v989, 16
      %v1255 = vrot.slane %v1253, 1
      %v1256 = vor.u32 %v1251, %v1255
      %v1258 = vshll.u32 %v1069, 16
      %v1260 = vrot.slane %v1258, 1
      %v1261 = vsel %vm556, %v1256, %v1260
      %1262 = vrot.lane.b32.xlu0 %v1081, 16
      %v1263 = vpop.permute.xlu0 %1262
      %1264 = vrot.lane.b32.xlu0 %v1093, 16
      %v1265 = vpop.permute.xlu0 %1264
      %1266 = vrot.lane.b32.xlu0 %v1105, 16
      %v1267 = vpop.permute.xlu0 %1266
      %1268 = vrot.lane.b32.xlu0 %v1117, 16
      %v1269 = vpop.permute.xlu0 %1268
      %1270 = vrot.lane.b32.xlu0 %v1129, 16
      %v1271 = vpop.permute.xlu0 %1270
      %1272 = vrot.lane.b32.xlu0 %v1141, 16
      %v1273 = vpop.permute.xlu0 %1272
      %1274 = vrot.lane.b32.xlu0 %v1153, 16
      %v1275 = vpop.permute.xlu0 %1274
      %1276 = vrot.lane.b32.xlu0 %v1165, 16
      %v1277 = vpop.permute.xlu0 %1276
      %1278 = vrot.lane.b32.xlu0 %v1177, 16
      %v1279 = vpop.permute.xlu0 %1278
      %1280 = vrot.lane.b32.xlu0 %v1189, 16
      %v1281 = vpop.permute.xlu0 %1280
      %1282 = vrot.lane.b32.xlu0 %v1201, 16
      %v1283 = vpop.permute.xlu0 %1282
      %1284 = vrot.lane.b32.xlu0 %v1213, 16
      %v1285 = vpop.permute.xlu0 %1284
      %1286 = vrot.lane.b32.xlu0 %v1225, 16
      %v1287 = vpop.permute.xlu0 %1286
      %1288 = vrot.lane.b32.xlu0 %v1237, 16
      %v1289 = vpop.permute.xlu0 %1288
      %1290 = vrot.lane.b32.xlu0 %v1249, 16
      %v1291 = vpop.permute.xlu0 %1290
      %1292 = vrot.lane.b32.xlu0 %v1261, 16
      %v1293 = vpop.permute.xlu0 %1292
      %v1310 = vunpack.c.l.b16 %v344
      %v1311 = vunpack.c.l.b16 %v345
      %v1312 = vunpack.c.l.b16 %v346
      %v1313 = vunpack.c.l.b16 %v347
      %v1314 = vunpack.c.l.b16 %v348
      %v1315 = vunpack.c.l.b16 %v349
      %v1316 = vunpack.c.l.b16 %v350
      %v1317 = vunpack.c.l.b16 %v351
      %v1318 = vunpack.c.l.b16 %v352
      %v1319 = vunpack.c.l.b16 %v353
      %v1320 = vunpack.c.l.b16 %v354
      %v1321 = vunpack.c.l.b16 %v355
      %v1322 = vunpack.c.l.b16 %v356
      %v1323 = vunpack.c.l.b16 %v357
      %v1324 = vunpack.c.l.b16 %v358
      %v1325 = vunpack.c.l.b16 %v359
      %v1326 = vpack.c.b16 %v943, %v1310
      %v1327 = vpack.c.b16 %v945, %v1311
      %v1328 = vpack.c.b16 %v947, %v1312
      %v1329 = vpack.c.b16 %v949, %v1313
      %v1330 = vpack.c.b16 %v951, %v1314
      %v1331 = vpack.c.b16 %v953, %v1315
      %v1332 = vpack.c.b16 %v955, %v1316
      %v1333 = vpack.c.b16 %v957, %v1317
      %v1334 = vpack.c.b16 %v959, %v1318
      %v1335 = vpack.c.b16 %v961, %v1319
      %v1336 = vpack.c.b16 %v963, %v1320
      %v1337 = vpack.c.b16 %v965, %v1321
      %v1338 = vpack.c.b16 %v967, %v1322
      %v1339 = vpack.c.b16 %v969, %v1323
      %v1340 = vpack.c.b16 %v971, %v1324
      %v1341 = vpack.c.b16 %v973, %v1325
      %v1342 = vrot.slane %v1326, 1
      %v1343 = vrot.slane %v1054, 1
      %v1344 = vsel %vm829, %v1342, %v1343
      %v1345 = vrot.slane %v1327, 1
      %v1346 = vrot.slane %v1055, 1
      %v1347 = vsel %vm829, %v1345, %v1346
      %v1348 = vrot.slane %v1328, 1
      %v1349 = vrot.slane %v1056, 1
      %v1350 = vsel %vm829, %v1348, %v1349
      %v1351 = vrot.slane %v1329, 1
      %v1352 = vrot.slane %v1057, 1
      %v1353 = vsel %vm829, %v1351, %v1352
      %v1354 = vrot.slane %v1330, 1
      %v1355 = vrot.slane %v1058, 1
      %v1356 = vsel %vm829, %v1354, %v1355
      %v1357 = vrot.slane %v1331, 1
      %v1358 = vrot.slane %v1059, 1
      %v1359 = vsel %vm829, %v1357, %v1358
      %v1360 = vrot.slane %v1332, 1
      %v1361 = vrot.slane %v1060, 1
      %v1362 = vsel %vm829, %v1360, %v1361
      %v1363 = vrot.slane %v1333, 1
      %v1364 = vrot.slane %v1061, 1
      %v1365 = vsel %vm829, %v1363, %v1364
      %v1366 = vrot.slane %v1334, 1
      %v1367 = vrot.slane %v1062, 1
      %v1368 = vsel %vm829, %v1366, %v1367
      %v1369 = vrot.slane %v1335, 1
      %v1370 = vrot.slane %v1063, 1
      %v1371 = vsel %vm829, %v1369, %v1370
      %v1372 = vrot.slane %v1336, 1
      %v1373 = vrot.slane %v1064, 1
      %v1374 = vsel %vm829, %v1372, %v1373
      %v1375 = vrot.slane %v1337, 1
      %v1376 = vrot.slane %v1065, 1
      %v1377 = vsel %vm829, %v1375, %v1376
      %v1378 = vrot.slane %v1338, 1
      %v1379 = vrot.slane %v1066, 1
      %v1380 = vsel %vm829, %v1378, %v1379
      %v1381 = vrot.slane %v1339, 1
      %v1382 = vrot.slane %v1067, 1
      %v1383 = vsel %vm829, %v1381, %v1382
      %v1384 = vrot.slane %v1340, 1
      %v1385 = vrot.slane %v1068, 1
      %v1386 = vsel %vm829, %v1384, %v1385
      %v1387 = vrot.slane %v1341, 1
      %v1388 = vrot.slane %v1069, 1
      %v1389 = vsel %vm829, %v1387, %v1388
      %1390 = vrot.lane.b32.xlu0 %v1344, 20
      %v1391 = vpop.permute.xlu0 %1390
      %1392 = vrot.lane.b32.xlu0 %v1347, 20
      %v1393 = vpop.permute.xlu0 %1392
      %1394 = vrot.lane.b32.xlu0 %v1350, 20
      %v1395 = vpop.permute.xlu0 %1394
      %1396 = vrot.lane.b32.xlu0 %v1353, 20
      %v1397 = vpop.permute.xlu0 %1396
      %1398 = vrot.lane.b32.xlu0 %v1356, 20
      %v1399 = vpop.permute.xlu0 %1398
      %1400 = vrot.lane.b32.xlu0 %v1359, 20
      %v1401 = vpop.permute.xlu0 %1400
      %1402 = vrot.lane.b32.xlu0 %v1362, 20
      %v1403 = vpop.permute.xlu0 %1402
      %1404 = vrot.lane.b32.xlu0 %v1365, 20
      %v1405 = vpop.permute.xlu0 %1404
      %1406 = vrot.lane.b32.xlu0 %v1368, 20
      %v1407 = vpop.permute.xlu0 %1406
      %1408 = vrot.lane.b32.xlu0 %v1371, 20
      %v1409 = vpop.permute.xlu0 %1408
      %1410 = vrot.lane.b32.xlu0 %v1374, 20
      %v1411 = vpop.permute.xlu0 %1410
      %1412 = vrot.lane.b32.xlu0 %v1377, 20
      %v1413 = vpop.permute.xlu0 %1412
      %1414 = vrot.lane.b32.xlu0 %v1380, 20
      %v1415 = vpop.permute.xlu0 %1414
      %1416 = vrot.lane.b32.xlu0 %v1383, 20
      %v1417 = vpop.permute.xlu0 %1416
      %1418 = vrot.lane.b32.xlu0 %v1386, 20
      %v1419 = vpop.permute.xlu0 %1418
      %1420 = vrot.lane.b32.xlu0 %v1389, 20
      %v1421 = vpop.permute.xlu0 %1420
      %v1454 = vunpack.c.l.b16 %v364
      %v1455 = vunpack.c.l.b16 %v365
      %v1456 = vunpack.c.l.b16 %v366
      %v1457 = vunpack.c.l.b16 %v367
      %v1458 = vunpack.c.l.b16 %v368
      %v1459 = vunpack.c.l.b16 %v369
      %v1460 = vunpack.c.l.b16 %v370
      %v1461 = vunpack.c.l.b16 %v371
      %v1462 = vunpack.c.l.b16 %v372
      %v1463 = vunpack.c.l.b16 %v373
      %v1464 = vunpack.c.l.b16 %v374
      %v1465 = vunpack.c.l.b16 %v375
      %v1466 = vunpack.c.l.b16 %v376
      %v1467 = vunpack.c.l.b16 %v377
      %v1468 = vunpack.c.l.b16 %v378
      %v1469 = vunpack.c.l.b16 %v379
      %v1470 = vunpack.c.l.b16 %v380
      %v1471 = vunpack.c.l.b16 %v381
      %v1472 = vunpack.c.l.b16 %v382
      %v1473 = vunpack.c.l.b16 %v383
      %v1474 = vunpack.c.l.b16 %v384
      %v1475 = vunpack.c.l.b16 %v385
      %v1476 = vunpack.c.l.b16 %v386
      %v1477 = vunpack.c.l.b16 %v387
      %v1478 = vunpack.c.l.b16 %v388
      %v1479 = vunpack.c.l.b16 %v389
      %v1480 = vunpack.c.l.b16 %v390
      %v1481 = vunpack.c.l.b16 %v391
      %v1482 = vunpack.c.l.b16 %v392
      %v1483 = vunpack.c.l.b16 %v393
      %v1484 = vunpack.c.l.b16 %v394
      %v1485 = vunpack.c.l.b16 %v395
      %v1486 = vpack.c.b16 %v1455, %v1454
      %v1487 = vpack.c.b16 %v1457, %v1456
      %v1488 = vpack.c.b16 %v1459, %v1458
      %v1489 = vpack.c.b16 %v1461, %v1460
      %v1490 = vpack.c.b16 %v1463, %v1462
      %v1491 = vpack.c.b16 %v1465, %v1464
      %v1492 = vpack.c.b16 %v1467, %v1466
      %v1493 = vpack.c.b16 %v1469, %v1468
      %v1494 = vpack.c.b16 %v1471, %v1470
      %v1495 = vpack.c.b16 %v1473, %v1472
      %v1496 = vpack.c.b16 %v1475, %v1474
      %v1497 = vpack.c.b16 %v1477, %v1476
      %v1498 = vpack.c.b16 %v1479, %v1478
      %v1499 = vpack.c.b16 %v1481, %v1480
      %v1500 = vpack.c.b16 %v1483, %v1482
      %v1501 = vpack.c.b16 %v1485, %v1484
      %1502 = vrot.lane.b32.xlu0 %v1486, 24
      %v1503 = vpop.permute.xlu0 %1502
      %1504 = vrot.lane.b32.xlu0 %v1487, 24
      %v1505 = vpop.permute.xlu0 %1504
      %1506 = vrot.lane.b32.xlu0 %v1488, 24
      %v1507 = vpop.permute.xlu0 %1506
      %1508 = vrot.lane.b32.xlu0 %v1489, 24
      %v1509 = vpop.permute.xlu0 %1508
      %1510 = vrot.lane.b32.xlu0 %v1490, 24
      %v1511 = vpop.permute.xlu0 %1510
      %1512 = vrot.lane.b32.xlu0 %v1491, 24
      %v1513 = vpop.permute.xlu0 %1512
      %1514 = vrot.lane.b32.xlu0 %v1492, 24
      %v1515 = vpop.permute.xlu0 %1514
      %1516 = vrot.lane.b32.xlu0 %v1493, 24
      %v1517 = vpop.permute.xlu0 %1516
      %1518 = vrot.lane.b32.xlu0 %v1494, 24
      %v1519 = vpop.permute.xlu0 %1518
      %1520 = vrot.lane.b32.xlu0 %v1495, 24
      %v1521 = vpop.permute.xlu0 %1520
      %1522 = vrot.lane.b32.xlu0 %v1496, 24
      %v1523 = vpop.permute.xlu0 %1522
      %1524 = vrot.lane.b32.xlu0 %v1497, 24
      %v1525 = vpop.permute.xlu0 %1524
      %1526 = vrot.lane.b32.xlu0 %v1498, 24
      %v1527 = vpop.permute.xlu0 %1526
      %1528 = vrot.lane.b32.xlu0 %v1499, 24
      %v1529 = vpop.permute.xlu0 %1528
      %1530 = vrot.lane.b32.xlu0 %v1500, 24
      %v1531 = vpop.permute.xlu0 %1530
      %1532 = vrot.lane.b32.xlu0 %v1501, 24
      %v1533 = vpop.permute.xlu0 %1532
      %v1550 = vunpack.c.l.b16 %v396
      %v1551 = vunpack.c.l.b16 %v397
      %v1552 = vunpack.c.l.b16 %v398
      %v1553 = vunpack.c.l.b16 %v399
      %v1554 = vunpack.c.l.b16 %v400
      %v1555 = vunpack.c.l.b16 %v401
      %v1556 = vunpack.c.l.b16 %v402
      %v1557 = vunpack.c.l.b16 %v403
      %v1558 = vunpack.c.l.b16 %v404
      %v1559 = vunpack.c.l.b16 %v405
      %v1560 = vunpack.c.l.b16 %v406
      %v1561 = vunpack.c.l.b16 %v407
      %v1562 = vunpack.c.l.b16 %v408
      %v1563 = vunpack.c.l.b16 %v409
      %v1564 = vunpack.c.l.b16 %v410
      %v1565 = vunpack.c.l.b16 %v411
      %v1566 = vpack.c.b16 %v1550, %v1550
      %v1567 = vpack.c.b16 %v1551, %v1551
      %v1568 = vpack.c.b16 %v1552, %v1552
      %v1569 = vpack.c.b16 %v1553, %v1553
      %v1570 = vpack.c.b16 %v1554, %v1554
      %v1571 = vpack.c.b16 %v1555, %v1555
      %v1572 = vpack.c.b16 %v1556, %v1556
      %v1573 = vpack.c.b16 %v1557, %v1557
      %v1574 = vpack.c.b16 %v1558, %v1558
      %v1575 = vpack.c.b16 %v1559, %v1559
      %v1576 = vpack.c.b16 %v1560, %v1560
      %v1577 = vpack.c.b16 %v1561, %v1561
      %v1578 = vpack.c.b16 %v1562, %v1562
      %v1579 = vpack.c.b16 %v1563, %v1563
      %v1580 = vpack.c.b16 %v1564, %v1564
      %v1581 = vpack.c.b16 %v1565, %v1565
      %v1583 = vshrl.u32 %v1486, 16
      %v1585 = vshll.u32 %v1486, 16
      %v1587 = vrot.slane %v1585, 1
      %v1588 = vor.u32 %v1583, %v1587
      %v1590 = vshll.u32 %v1566, 16
      %v1592 = vrot.slane %v1590, 1
      %v1593 = vsel %vm556, %v1588, %v1592
      %v1595 = vshrl.u32 %v1487, 16
      %v1597 = vshll.u32 %v1487, 16
      %v1599 = vrot.slane %v1597, 1
      %v1600 = vor.u32 %v1595, %v1599
      %v1602 = vshll.u32 %v1567, 16
      %v1604 = vrot.slane %v1602, 1
      %v1605 = vsel %vm556, %v1600, %v1604
      %v1607 = vshrl.u32 %v1488, 16
      %v1609 = vshll.u32 %v1488, 16
      %v1611 = vrot.slane %v1609, 1
      %v1612 = vor.u32 %v1607, %v1611
      %v1614 = vshll.u32 %v1568, 16
      %v1616 = vrot.slane %v1614, 1
      %v1617 = vsel %vm556, %v1612, %v1616
      %v1619 = vshrl.u32 %v1489, 16
      %v1621 = vshll.u32 %v1489, 16
      %v1623 = vrot.slane %v1621, 1
      %v1624 = vor.u32 %v1619, %v1623
      %v1626 = vshll.u32 %v1569, 16
      %v1628 = vrot.slane %v1626, 1
      %v1629 = vsel %vm556, %v1624, %v1628
      %v1631 = vshrl.u32 %v1490, 16
      %v1633 = vshll.u32 %v1490, 16
      %v1635 = vrot.slane %v1633, 1
      %v1636 = vor.u32 %v1631, %v1635
      %v1638 = vshll.u32 %v1570, 16
      %v1640 = vrot.slane %v1638, 1
      %v1641 = vsel %vm556, %v1636, %v1640
      %v1643 = vshrl.u32 %v1491, 16
      %v1645 = vshll.u32 %v1491, 16
      %v1647 = vrot.slane %v1645, 1
      %v1648 = vor.u32 %v1643, %v1647
      %v1650 = vshll.u32 %v1571, 16
      %v1652 = vrot.slane %v1650, 1
      %v1653 = vsel %vm556, %v1648, %v1652
      %v1655 = vshrl.u32 %v1492, 16
      %v1657 = vshll.u32 %v1492, 16
      %v1659 = vrot.slane %v1657, 1
      %v1660 = vor.u32 %v1655, %v1659
      %v1662 = vshll.u32 %v1572, 16
      %v1664 = vrot.slane %v1662, 1
      %v1665 = vsel %vm556, %v1660, %v1664
      %v1667 = vshrl.u32 %v1493, 16
      %v1669 = vshll.u32 %v1493, 16
      %v1671 = vrot.slane %v1669, 1
      %v1672 = vor.u32 %v1667, %v1671
      %v1674 = vshll.u32 %v1573, 16
      %v1676 = vrot.slane %v1674, 1
      %v1677 = vsel %vm556, %v1672, %v1676
      %v1679 = vshrl.u32 %v1494, 16
      %v1681 = vshll.u32 %v1494, 16
      %v1683 = vrot.slane %v1681, 1
      %v1684 = vor.u32 %v1679, %v1683
      %v1686 = vshll.u32 %v1574, 16
      %v1688 = vrot.slane %v1686, 1
      %v1689 = vsel %vm556, %v1684, %v1688
      %v1691 = vshrl.u32 %v1495, 16
      %v1693 = vshll.u32 %v1495, 16
      %v1695 = vrot.slane %v1693, 1
      %v1696 = vor.u32 %v1691, %v1695
      %v1698 = vshll.u32 %v1575, 16
      %v1700 = vrot.slane %v1698, 1
      %v1701 = vsel %vm556, %v1696, %v1700
      %v1703 = vshrl.u32 %v1496, 16
      %v1705 = vshll.u32 %v1496, 16
      %v1707 = vrot.slane %v1705, 1
      %v1708 = vor.u32 %v1703, %v1707
      %v1710 = vshll.u32 %v1576, 16
      %v1712 = vrot.slane %v1710, 1
      %v1713 = vsel %vm556, %v1708, %v1712
      %v1715 = vshrl.u32 %v1497, 16
      %v1717 = vshll.u32 %v1497, 16
      %v1719 = vrot.slane %v1717, 1
      %v1720 = vor.u32 %v1715, %v1719
      %v1722 = vshll.u32 %v1577, 16
      %v1724 = vrot.slane %v1722, 1
      %v1725 = vsel %vm556, %v1720, %v1724
      %v1727 = vshrl.u32 %v1498, 16
      %v1729 = vshll.u32 %v1498, 16
      %v1731 = vrot.slane %v1729, 1
      %v1732 = vor.u32 %v1727, %v1731
      %v1734 = vshll.u32 %v1578, 16
      %v1736 = vrot.slane %v1734, 1
      %v1737 = vsel %vm556, %v1732, %v1736
      %v1739 = vshrl.u32 %v1499, 16
      %v1741 = vshll.u32 %v1499, 16
      %v1743 = vrot.slane %v1741, 1
      %v1744 = vor.u32 %v1739, %v1743
      %v1746 = vshll.u32 %v1579, 16
      %v1748 = vrot.slane %v1746, 1
      %v1749 = vsel %vm556, %v1744, %v1748
      %v1751 = vshrl.u32 %v1500, 16
      %v1753 = vshll.u32 %v1500, 16
      %v1755 = vrot.slane %v1753, 1
      %v1756 = vor.u32 %v1751, %v1755
      %v1758 = vshll.u32 %v1580, 16
      %v1760 = vrot.slane %v1758, 1
      %v1761 = vsel %vm556, %v1756, %v1760
      %v1763 = vshrl.u32 %v1501, 16
      %v1765 = vshll.u32 %v1501, 16
      %v1767 = vrot.slane %v1765, 1
      %v1768 = vor.u32 %v1763, %v1767
      %v1770 = vshll.u32 %v1581, 16
      %v1772 = vrot.slane %v1770, 1
      %v1773 = vsel %vm556, %v1768, %v1772
      %1774 = vrot.lane.b32.xlu0 %v1593, 28
      %v1775 = vpop.permute.xlu0 %1774
      %1776 = vrot.lane.b32.xlu0 %v1605, 28
      %v1777 = vpop.permute.xlu0 %1776
      %1778 = vrot.lane.b32.xlu0 %v1617, 28
      %v1779 = vpop.permute.xlu0 %1778
      %1780 = vrot.lane.b32.xlu0 %v1629, 28
      %v1781 = vpop.permute.xlu0 %1780
      %1782 = vrot.lane.b32.xlu0 %v1641, 28
      %v1783 = vpop.permute.xlu0 %1782
      %1784 = vrot.lane.b32.xlu0 %v1653, 28
      %v1785 = vpop.permute.xlu0 %1784
      %1786 = vrot.lane.b32.xlu0 %v1665, 28
      %v1787 = vpop.permute.xlu0 %1786
      %1788 = vrot.lane.b32.xlu0 %v1677, 28
      %v1789 = vpop.permute.xlu0 %1788
      %1790 = vrot.lane.b32.xlu0 %v1689, 28
      %v1791 = vpop.permute.xlu0 %1790
      %1792 = vrot.lane.b32.xlu0 %v1701, 28
      %v1793 = vpop.permute.xlu0 %1792
      %1794 = vrot.lane.b32.xlu0 %v1713, 28
      %v1795 = vpop.permute.xlu0 %1794
      %1796 = vrot.lane.b32.xlu0 %v1725, 28
      %v1797 = vpop.permute.xlu0 %1796
      %1798 = vrot.lane.b32.xlu0 %v1737, 28
      %v1799 = vpop.permute.xlu0 %1798
      %1800 = vrot.lane.b32.xlu0 %v1749, 28
      %v1801 = vpop.permute.xlu0 %1800
      %1802 = vrot.lane.b32.xlu0 %v1761, 28
      %v1803 = vpop.permute.xlu0 %1802
      %1804 = vrot.lane.b32.xlu0 %v1773, 28
      %v1805 = vpop.permute.xlu0 %1804
      %v1822 = vunpack.c.l.b16 %v412
      %v1823 = vunpack.c.l.b16 %v413
      %v1824 = vunpack.c.l.b16 %v414
      %v1825 = vunpack.c.l.b16 %v415
      %v1826 = vunpack.c.l.b16 %v416
      %v1827 = vunpack.c.l.b16 %v417
      %v1828 = vunpack.c.l.b16 %v418
      %v1829 = vunpack.c.l.b16 %v419
      %v1830 = vunpack.c.l.b16 %v420
      %v1831 = vunpack.c.l.b16 %v421
      %v1832 = vunpack.c.l.b16 %v422
      %v1833 = vunpack.c.l.b16 %v423
      %v1834 = vunpack.c.l.b16 %v424
      %v1835 = vunpack.c.l.b16 %v425
      %v1836 = vunpack.c.l.b16 %v426
      %v1837 = vunpack.c.l.b16 %v427
      %v1838 = vpack.c.b16 %v1455, %v1822
      %v1839 = vpack.c.b16 %v1457, %v1823
      %v1840 = vpack.c.b16 %v1459, %v1824
      %v1841 = vpack.c.b16 %v1461, %v1825
      %v1842 = vpack.c.b16 %v1463, %v1826
      %v1843 = vpack.c.b16 %v1465, %v1827
      %v1844 = vpack.c.b16 %v1467, %v1828
      %v1845 = vpack.c.b16 %v1469, %v1829
      %v1846 = vpack.c.b16 %v1471, %v1830
      %v1847 = vpack.c.b16 %v1473, %v1831
      %v1848 = vpack.c.b16 %v1475, %v1832
      %v1849 = vpack.c.b16 %v1477, %v1833
      %v1850 = vpack.c.b16 %v1479, %v1834
      %v1851 = vpack.c.b16 %v1481, %v1835
      %v1852 = vpack.c.b16 %v1483, %v1836
      %v1853 = vpack.c.b16 %v1485, %v1837
      %v1854 = vrot.slane %v1838, 1
      %v1855 = vrot.slane %v1566, 1
      %v1856 = vsel %vm829, %v1854, %v1855
      %v1857 = vrot.slane %v1839, 1
      %v1858 = vrot.slane %v1567, 1
      %v1859 = vsel %vm829, %v1857, %v1858
      %v1860 = vrot.slane %v1840, 1
      %v1861 = vrot.slane %v1568, 1
      %v1862 = vsel %vm829, %v1860, %v1861
      %v1863 = vrot.slane %v1841, 1
      %v1864 = vrot.slane %v1569, 1
      %v1865 = vsel %vm829, %v1863, %v1864
      %v1866 = vrot.slane %v1842, 1
      %v1867 = vrot.slane %v1570, 1
      %v1868 = vsel %vm829, %v1866, %v1867
      %v1869 = vrot.slane %v1843, 1
      %v1870 = vrot.slane %v1571, 1
      %v1871 = vsel %vm829, %v1869, %v1870
      %v1872 = vrot.slane %v1844, 1
      %v1873 = vrot.slane %v1572, 1
      %v1874 = vsel %vm829, %v1872, %v1873
      %v1875 = vrot.slane %v1845, 1
      %v1876 = vrot.slane %v1573, 1
      %v1877 = vsel %vm829, %v1875, %v1876
      %v1878 = vrot.slane %v1846, 1
      %v1879 = vrot.slane %v1574, 1
      %v1880 = vsel %vm829, %v1878, %v1879
      %v1881 = vrot.slane %v1847, 1
      %v1882 = vrot.slane %v1575, 1
      %v1883 = vsel %vm829, %v1881, %v1882
      %v1884 = vrot.slane %v1848, 1
      %v1885 = vrot.slane %v1576, 1
      %v1886 = vsel %vm829, %v1884, %v1885
      %v1887 = vrot.slane %v1849, 1
      %v1888 = vrot.slane %v1577, 1
      %v1889 = vsel %vm829, %v1887, %v1888
      %v1890 = vrot.slane %v1850, 1
      %v1891 = vrot.slane %v1578, 1
      %v1892 = vsel %vm829, %v1890, %v1891
      %v1893 = vrot.slane %v1851, 1
      %v1894 = vrot.slane %v1579, 1
      %v1895 = vsel %vm829, %v1893, %v1894
      %v1896 = vrot.slane %v1852, 1
      %v1897 = vrot.slane %v1580, 1
      %v1898 = vsel %vm829, %v1896, %v1897
      %v1899 = vrot.slane %v1853, 1
      %v1900 = vrot.slane %v1581, 1
      %v1901 = vsel %vm829, %v1899, %v1900
      %1902 = vrot.lane.b32.xlu0 %v1856, 32
      %v1903 = vpop.permute.xlu0 %1902
      %1904 = vrot.lane.b32.xlu0 %v1859, 32
      %v1905 = vpop.permute.xlu0 %1904
      %1906 = vrot.lane.b32.xlu0 %v1862, 32
      %v1907 = vpop.permute.xlu0 %1906
      %1908 = vrot.lane.b32.xlu0 %v1865, 32
      %v1909 = vpop.permute.xlu0 %1908
      %1910 = vrot.lane.b32.xlu0 %v1868, 32
      %v1911 = vpop.permute.xlu0 %1910
      %1912 = vrot.lane.b32.xlu0 %v1871, 32
      %v1913 = vpop.permute.xlu0 %1912
      %1914 = vrot.lane.b32.xlu0 %v1874, 32
      %v1915 = vpop.permute.xlu0 %1914
      %1916 = vrot.lane.b32.xlu0 %v1877, 32
      %v1917 = vpop.permute.xlu0 %1916
      %1918 = vrot.lane.b32.xlu0 %v1880, 32
      %v1919 = vpop.permute.xlu0 %1918
      %1920 = vrot.lane.b32.xlu0 %v1883, 32
      %v1921 = vpop.permute.xlu0 %1920
      %1922 = vrot.lane.b32.xlu0 %v1886, 32
      %v1923 = vpop.permute.xlu0 %1922
      %1924 = vrot.lane.b32.xlu0 %v1889, 32
      %v1925 = vpop.permute.xlu0 %1924
      %1926 = vrot.lane.b32.xlu0 %v1892, 32
      %v1927 = vpop.permute.xlu0 %1926
      %1928 = vrot.lane.b32.xlu0 %v1895, 32
      %v1929 = vpop.permute.xlu0 %1928
      %1930 = vrot.lane.b32.xlu0 %v1898, 32
      %v1931 = vpop.permute.xlu0 %1930
      %1932 = vrot.lane.b32.xlu0 %v1901, 32
      %v1933 = vpop.permute.xlu0 %1932
      %vm1934 = vcmask 31744
      %v1936 = vsel %vm1934, %v492, %v750
      %v1938 = vsel %vm1934, %v493, %v752
      %v1940 = vsel %vm1934, %v494, %v754
      %v1942 = vsel %vm1934, %v495, %v756
      %v1944 = vsel %vm1934, %v496, %v758
      %v1946 = vsel %vm1934, %v497, %v760
      %v1948 = vsel %vm1934, %v498, %v762
      %v1950 = vsel %vm1934, %v499, %v764
      %v1952 = vsel %vm1934, %v500, %v766
      %v1954 = vsel %vm1934, %v501, %v768
      %v1956 = vsel %vm1934, %v502, %v770
      %v1958 = vsel %vm1934, %v503, %v772
      %v1960 = vsel %vm1934, %v504, %v774
      %v1962 = vsel %vm1934, %v505, %v776
      %v1964 = vsel %vm1934, %v506, %v778
      %v1966 = vsel %vm1934, %v507, %v780
      %vm1967 = vcmask 64512
      %v1969 = vsel %vm1967, %v1936, %v879
      %v1971 = vsel %vm1967, %v1938, %v881
      %v1973 = vsel %vm1967, %v1940, %v883
      %v1975 = vsel %vm1967, %v1942, %v885
      %v1977 = vsel %vm1967, %v1944, %v887
      %v1979 = vsel %vm1967, %v1946, %v889
      %v1981 = vsel %vm1967, %v1948, %v891
      %v1983 = vsel %vm1967, %v1950, %v893
      %v1985 = vsel %vm1967, %v1952, %v895
      %v1987 = vsel %vm1967, %v1954, %v897
      %v1989 = vsel %vm1967, %v1956, %v899
      %v1991 = vsel %vm1967, %v1958, %v901
      %v1993 = vsel %vm1967, %v1960, %v903
      %v1995 = vsel %vm1967, %v1962, %v905
      %v1997 = vsel %vm1967, %v1964, %v907
      %v1999 = vsel %vm1967, %v1966, %v909
      %vm2000 = vcmask 97280
      %v2002 = vsel %vm2000, %v1969, %v991
      %v2004 = vsel %vm2000, %v1971, %v993
      %v2006 = vsel %vm2000, %v1973, %v995
      %v2008 = vsel %vm2000, %v1975, %v997
      %v2010 = vsel %vm2000, %v1977, %v999
      %v2012 = vsel %vm2000, %v1979, %v1001
      %v2014 = vsel %vm2000, %v1981, %v1003
      %v2016 = vsel %vm2000, %v1983, %v1005
      %v2018 = vsel %vm2000, %v1985, %v1007
      %v2020 = vsel %vm2000, %v1987, %v1009
      %v2022 = vsel %vm2000, %v1989, %v1011
      %v2024 = vsel %vm2000, %v1991, %v1013
      %v2026 = vsel %vm2000, %v1993, %v1015
      %v2028 = vsel %vm2000, %v1995, %v1017
      %v2030 = vsel %vm2000, %v1997, %v1019
      %v2032 = vsel %vm2000, %v1999, %v1021
      %vm2033 = vcmask 130048
      %v2035 = vsel %vm2033, %v2002, %v1263
      %v2037 = vsel %vm2033, %v2004, %v1265
      %v2039 = vsel %vm2033, %v2006, %v1267
      %v2041 = vsel %vm2033, %v2008, %v1269
      %v2043 = vsel %vm2033, %v2010, %v1271
      %v2045 = vsel %vm2033, %v2012, %v1273
      %v2047 = vsel %vm2033, %v2014, %v1275
      %v2049 = vsel %vm2033, %v2016, %v1277
      %v2051 = vsel %vm2033, %v2018, %v1279
      %v2053 = vsel %vm2033, %v2020, %v1281
      %v2055 = vsel %vm2033, %v2022, %v1283
      %v2057 = vsel %vm2033, %v2024, %v1285
      %v2059 = vsel %vm2033, %v2026, %v1287
      %v2061 = vsel %vm2033, %v2028, %v1289
      %v2063 = vsel %vm2033, %v2030, %v1291
      %v2065 = vsel %vm2033, %v2032, %v1293
      %vm2066 = vcmask 162816
      %v2068 = vsel %vm2066, %v2035, %v1391
      %v2070 = vsel %vm2066, %v2037, %v1393
      %v2072 = vsel %vm2066, %v2039, %v1395
      %v2074 = vsel %vm2066, %v2041, %v1397
      %v2076 = vsel %vm2066, %v2043, %v1399
      %v2078 = vsel %vm2066, %v2045, %v1401
      %v2080 = vsel %vm2066, %v2047, %v1403
      %v2082 = vsel %vm2066, %v2049, %v1405
      %v2084 = vsel %vm2066, %v2051, %v1407
      %v2086 = vsel %vm2066, %v2053, %v1409
      %v2088 = vsel %vm2066, %v2055, %v1411
      %v2090 = vsel %vm2066, %v2057, %v1413
      %v2092 = vsel %vm2066, %v2059, %v1415
      %v2094 = vsel %vm2066, %v2061, %v1417
      %v2096 = vsel %vm2066, %v2063, %v1419
      %v2098 = vsel %vm2066, %v2065, %v1421
      %vm2099 = vcmask 195584
      %v2101 = vsel %vm2099, %v2068, %v1503
      %v2103 = vsel %vm2099, %v2070, %v1505
      %v2105 = vsel %vm2099, %v2072, %v1507
      %v2107 = vsel %vm2099, %v2074, %v1509
      %v2109 = vsel %vm2099, %v2076, %v1511
      %v2111 = vsel %vm2099, %v2078, %v1513
      %v2113 = vsel %vm2099, %v2080, %v1515
      %v2115 = vsel %vm2099, %v2082, %v1517
      %v2117 = vsel %vm2099, %v2084, %v1519
      %v2119 = vsel %vm2099, %v2086, %v1521
      %v2121 = vsel %vm2099, %v2088, %v1523
      %v2123 = vsel %vm2099, %v2090, %v1525
      %v2125 = vsel %vm2099, %v2092, %v1527
      %v2127 = vsel %vm2099, %v2094, %v1529
      %v2129 = vsel %vm2099, %v2096, %v1531
      %v2131 = vsel %vm2099, %v2098, %v1533
      %vm2132 = vcmask 228352
      %v2134 = vsel %vm2132, %v2101, %v1775
      %v2136 = vsel %vm2132, %v2103, %v1777
      %v2138 = vsel %vm2132, %v2105, %v1779
      %v2140 = vsel %vm2132, %v2107, %v1781
      %v2142 = vsel %vm2132, %v2109, %v1783
      %v2144 = vsel %vm2132, %v2111, %v1785
      %v2146 = vsel %vm2132, %v2113, %v1787
      %v2148 = vsel %vm2132, %v2115, %v1789
      %v2150 = vsel %vm2132, %v2117, %v1791
      %v2152 = vsel %vm2132, %v2119, %v1793
      %v2154 = vsel %vm2132, %v2121, %v1795
      %v2156 = vsel %vm2132, %v2123, %v1797
      %v2158 = vsel %vm2132, %v2125, %v1799
      %v2160 = vsel %vm2132, %v2127, %v1801
      %v2162 = vsel %vm2132, %v2129, %v1803
      %v2164 = vsel %vm2132, %v2131, %v1805
      %vm2165 = vcmask 261120
      %v2167 = vsel %vm2165, %v2134, %v1903
      %v2169 = vsel %vm2165, %v2136, %v1905
      %v2171 = vsel %vm2165, %v2138, %v1907
      %v2173 = vsel %vm2165, %v2140, %v1909
      %v2175 = vsel %vm2165, %v2142, %v1911
      %v2177 = vsel %vm2165, %v2144, %v1913
      %v2179 = vsel %vm2165, %v2146, %v1915
      %v2181 = vsel %vm2165, %v2148, %v1917
      %v2183 = vsel %vm2165, %v2150, %v1919
      %v2185 = vsel %vm2165, %v2152, %v1921
      %v2187 = vsel %vm2165, %v2154, %v1923
      %v2189 = vsel %vm2165, %v2156, %v1925
      %v2191 = vsel %vm2165, %v2158, %v1927
      %v2193 = vsel %vm2165, %v2160, %v1929
      %v2195 = vsel %vm2165, %v2162, %v1931
      %v2197 = vsel %vm2165, %v2164, %v1933
      %v2198 = vld [vmem:[%s1] sm:$0xf]
      %v2199 = vld [vmem:[%s1 + $0x4] sm:$0xf]
      %v2200 = vld [vmem:[%s1 + $0x8] sm:$0xf]
      %v2201 = vld [vmem:[%s1 + $0xc] sm:$0xf]
      %v2202 = vld [vmem:[%s1 + $0x10] sm:$0x3]
      %v2208 = vunpack.c.l.b16 %v2198
      %v2209 = vunpack.c.l.b16 %v2199
      %v2210 = vunpack.c.l.b16 %v2200
      %v2211 = vunpack.c.l.b16 %v2201
      %v2212 = vunpack.c.l.b16 %v2202
      %v2213 = vpack.c.b16 %v2209, %v2208
      %v2214 = vpack.c.b16 %v2211, %v2210
      %v2215 = vpack.c.b16 %v2212, %v2212
      %vm2218 = vcmask 293888
      %v2219 = vsel %vm2218, %v2167, 0
      %v2221 = vsel %vm2218, %v2169, 0
      %v2223 = vsel %vm2218, %v2171, 0
      %v2225 = vsel %vm2218, %v2173, 0
      %v2227 = vsel %vm2218, %v2175, 0
      %v2229 = vsel %vm2218, %v2177, 0
      %v2231 = vsel %vm2218, %v2179, 0
      %v2233 = vsel %vm2218, %v2181, 0
      %v2235 = vsel %vm2218, %v2183, 0
      %v2237 = vsel %vm2218, %v2185, 0
      %v2239 = vsel %vm2218, %v2187, 0
      %v2241 = vsel %vm2218, %v2189, 0
      %v2243 = vsel %vm2218, %v2191, 0
      %v2245 = vsel %vm2218, %v2193, 0
      %v2247 = vsel %vm2218, %v2195, 0
      %v2249 = vsel %vm2218, %v2197, 0
      %vm2251 = vcmask 1041408
      %v2253 = vsel %vm2251, %v2215, 0
      %2255 = vmatprep.subr.bf16.mxu0 0
      %2256 = vmatpush1.bf16.msra.mxu0 %v2213
      %2257 = vmatprep.subr.bf16.mxu0 0
      %2258 = vmatpush1.bf16.msra.mxu0 %v2214
      %2259 = vmatprep.subr.bf16.mxu0 0
      %2260 = vmatpush1.bf16.msra.mxu0 %v2253
      %2261 = vmatprep.subr.bf16.mxu0 0
      %2262 = vmatpush1.bf16.msra.mxu0 0
      %2263 = vmatprep.subr.bf16.mxu0 0
      %2264 = vmatpush1.bf16.msra.mxu0 0
      %2265 = vmatprep.subr.bf16.mxu0 0
      %2266 = vmatpush1.bf16.msra.mxu0 0
      %2267 = vmatprep.subr.bf16.mxu0 0
      %2268 = vmatpush1.bf16.msra.mxu0 0
      %2269 = vmatprep.subr.bf16.mxu0 0
      %2270 = vmatpush1.bf16.msra.mxu0 0
      %2271 = vmatprep.subr.bf16.mxu0 0
      %2272 = vmatpush1.bf16.msra.mxu0 0
      %2273 = vmatprep.subr.bf16.mxu0 0
      %2274 = vmatpush1.bf16.msra.mxu0 0
      %2275 = vmatprep.subr.bf16.mxu0 0
      %2276 = vmatpush1.bf16.msra.mxu0 0
      %2277 = vmatprep.subr.bf16.mxu0 0
      %2278 = vmatpush1.bf16.msra.mxu0 0
      %2279 = vmatprep.subr.bf16.mxu0 0
      %2280 = vmatpush1.bf16.msra.mxu0 0
      %2281 = vmatprep.subr.bf16.mxu0 0
      %2282 = vmatpush1.bf16.msra.mxu0 0
      %2283 = vmatprep.subr.bf16.mxu0 0
      %2284 = vmatpush1.bf16.msra.mxu0 0
      %2285 = vmatprep.subr.bf16.mxu0 0
      %2286 = vmatpush1.bf16.msra.mxu0 0
      %2287 = vmatprep.mubr.bf16.mxu0 0
      %2288 = vmatmul.mubr.bf16.gmra.mrb[0].mxu0 %v2219
      %v2289 = vpop.f32.mrb[0].mxu0
      %v2290 = vadd.f32 0.0, %v2289
      %v2291 = vpop.f32.mrb[0].mxu0
      %v2292 = vpop.f32.mrb[0].mxu0
      %v2293 = vadd.f32 0.0, %v2292
      %v2294 = vpop.f32.mrb[0].mxu0
      %2295 = vmatprep.mubr.bf16.mxu0 0
      %2296 = vmatmul.mubr.bf16.gmra.mrb[0].mxu0 %v2221
      %v2297 = vpop.f32.mrb[0].mxu0
      %v2298 = vadd.f32 0.0, %v2297
      %v2299 = vpop.f32.mrb[0].mxu0
      %v2300 = vpop.f32.mrb[0].mxu0
      %v2301 = vadd.f32 0.0, %v2300
      %v2302 = vpop.f32.mrb[0].mxu0
      %2303 = vmatprep.mubr.bf16.mxu0 0
      %2304 = vmatmul.mubr.bf16.gmra.mrb[0].mxu0 %v2223
      %v2305 = vpop.f32.mrb[0].mxu0
      %v2306 = vadd.f32 0.0, %v2305
      %v2307 = vpop.f32.mrb[0].mxu0
      %v2308 = vpop.f32.mrb[0].mxu0
      %v2309 = vadd.f32 0.0, %v2308
      %v2310 = vpop.f32.mrb[0].mxu0
      %2311 = vmatprep.mubr.bf16.mxu0 0
      %2312 = vmatmul.mubr.bf16.gmra.mrb[0].mxu0 %v2225
      %v2313 = vpop.f32.mrb[0].mxu0
      %v2314 = vadd.f32 0.0, %v2313
      %v2315 = vpop.f32.mrb[0].mxu0
      %v2316 = vpop.f32.mrb[0].mxu0
      %v2317 = vadd.f32 0.0, %v2316
      %v2318 = vpop.f32.mrb[0].mxu0
      %2319 = vmatprep.mubr.bf16.mxu0 0
      %2320 = vmatmul.mubr.bf16.gmra.mrb[0].mxu0 %v2227
      %v2321 = vpop.f32.mrb[0].mxu0
      %v2322 = vadd.f32 0.0, %v2321
      %v2323 = vpop.f32.mrb[0].mxu0
      %v2324 = vpop.f32.mrb[0].mxu0
      %v2325 = vadd.f32 0.0, %v2324
      %v2326 = vpop.f32.mrb[0].mxu0
      %2327 = vmatprep.mubr.bf16.mxu0 0
      %2328 = vmatmul.mubr.bf16.gmra.mrb[0].mxu0 %v2229
      %v2329 = vpop.f32.mrb[0].mxu0
      %v2330 = vadd.f32 0.0, %v2329
      %v2331 = vpop.f32.mrb[0].mxu0
      %v2332 = vpop.f32.mrb[0].mxu0
      %v2333 = vadd.f32 0.0, %v2332
      %v2334 = vpop.f32.mrb[0].mxu0
      %2335 = vmatprep.mubr.bf16.mxu0 0
      %2336 = vmatmul.mubr.bf16.gmra.mrb[0].mxu0 %v2231
      %v2337 = vpop.f32.mrb[0].mxu0
      %v2338 = vadd.f32 0.0, %v2337
      %v2339 = vpop.f32.mrb[0].mxu0
      %v2340 = vpop.f32.mrb[0].mxu0
      %v2341 = vadd.f32 0.0, %v2340
      %v2342 = vpop.f32.mrb[0].mxu0
      %2343 = vmatprep.mubr.bf16.mxu0 0
      %2344 = vmatmul.mubr.bf16.gmra.mrb[0].mxu0 %v2233
      %v2345 = vpop.f32.mrb[0].mxu0
      %v2346 = vadd.f32 0.0, %v2345
      %v2347 = vpop.f32.mrb[0].mxu0
      %v2348 = vpop.f32.mrb[0].mxu0
      %v2349 = vadd.f32 0.0, %v2348
      %v2350 = vpop.f32.mrb[0].mxu0
      %2351 = vmatprep.mubr.bf16.mxu0 0
      %2352 = vmatmul.mubr.bf16.gmra.mrb[0].mxu0 %v2235
      %v2353 = vpop.f32.mrb[0].mxu0
      %v2354 = vadd.f32 0.0, %v2353
      %v2355 = vpop.f32.mrb[0].mxu0
      %v2356 = vpop.f32.mrb[0].mxu0
      %v2357 = vadd.f32 0.0, %v2356
      %v2358 = vpop.f32.mrb[0].mxu0
      %2359 = vmatprep.mubr.bf16.mxu0 0
      %2360 = vmatmul.mubr.bf16.gmra.mrb[0].mxu0 %v2237
      %v2361 = vpop.f32.mrb[0].mxu0
      %v2362 = vadd.f32 0.0, %v2361
      %v2363 = vpop.f32.mrb[0].mxu0
      %v2364 = vpop.f32.mrb[0].mxu0
      %v2365 = vadd.f32 0.0, %v2364
      %v2366 = vpop.f32.mrb[0].mxu0
      %2367 = vmatprep.mubr.bf16.mxu0 0
      %2368 = vmatmul.mubr.bf16.gmra.mrb[0].mxu0 %v2239
      %v2369 = vpop.f32.mrb[0].mxu0
      %v2370 = vadd.f32 0.0, %v2369
      %v2371 = vpop.f32.mrb[0].mxu0
      %v2372 = vpop.f32.mrb[0].mxu0
      %v2373 = vadd.f32 0.0, %v2372
      %v2374 = vpop.f32.mrb[0].mxu0
      %2375 = vmatprep.mubr.bf16.mxu0 0
      %2376 = vmatmul.mubr.bf16.gmra.mrb[0].mxu0 %v2241
      %v2377 = vpop.f32.mrb[0].mxu0
      %v2378 = vadd.f32 0.0, %v2377
      %v2379 = vpop.f32.mrb[0].mxu0
      %v2380 = vpop.f32.mrb[0].mxu0
      %v2381 = vadd.f32 0.0, %v2380
      %v2382 = vpop.f32.mrb[0].mxu0
      %2383 = vmatprep.mubr.bf16.mxu0 0
      %2384 = vmatmul.mubr.bf16.gmra.mrb[0].mxu0 %v2243
      %v2385 = vpop.f32.mrb[0].mxu0
      %v2386 = vadd.f32 0.0, %v2385
      %v2387 = vpop.f32.mrb[0].mxu0
      %v2388 = vpop.f32.mrb[0].mxu0
      %v2389 = vadd.f32 0.0, %v2388
      %v2390 = vpop.f32.mrb[0].mxu0
      %2391 = vmatprep.mubr.bf16.mxu0 0
      %2392 = vmatmul.mubr.bf16.gmra.mrb[0].mxu0 %v2245
      %v2393 = vpop.f32.mrb[0].mxu0
      %v2394 = vadd.f32 0.0, %v2393
      %v2395 = vpop.f32.mrb[0].mxu0
      %v2396 = vpop.f32.mrb[0].mxu0
      %v2397 = vadd.f32 0.0, %v2396
      %v2398 = vpop.f32.mrb[0].mxu0
      %2399 = vmatprep.mubr.bf16.mxu0 0
      %2400 = vmatmul.mubr.bf16.gmra.mrb[0].mxu0 %v2247
      %v2401 = vpop.f32.mrb[0].mxu0
      %v2402 = vadd.f32 0.0, %v2401
      %v2403 = vpop.f32.mrb[0].mxu0
      %v2404 = vpop.f32.mrb[0].mxu0
      %v2405 = vadd.f32 0.0, %v2404
      %v2406 = vpop.f32.mrb[0].mxu0
      %2407 = vmatprep.mubr.bf16.mxu0 0
      %2408 = vmatmul.mubr.bf16.gmra.mrb[0].mxu0 %v2249
      %v2409 = vpop.f32.mrb[0].mxu0
      %v2410 = vadd.f32 0.0, %v2409
      %v2411 = vpop.f32.mrb[0].mxu0
      %v2412 = vpop.f32.mrb[0].mxu0
      %v2413 = vadd.f32 0.0, %v2412
      %v2414 = vpop.f32.mrb[0].mxu0
      %2415 = vdwg.mxu0
      %v2416 = vld [vmem:[%s2] sm:$0x1]
      %v2418 = vlaneseq
      %v2419 = vshrl.u32 %v2418, 7
      %v2420 = vsub.s32 0, %v2419
      %v2421 = vrot.slane %v2416, %v2420
      %v2423 = vmul.f32 %v2290, %v2421
      %v2424 = vmul.f32 %v2293, %v2421
      %v2425 = vmul.f32 %v2298, %v2421
      %v2426 = vmul.f32 %v2301, %v2421
      %v2427 = vmul.f32 %v2306, %v2421
      %v2428 = vmul.f32 %v2309, %v2421
      %v2429 = vmul.f32 %v2314, %v2421
      %v2430 = vmul.f32 %v2317, %v2421
      %v2431 = vmul.f32 %v2322, %v2421
      %v2432 = vmul.f32 %v2325, %v2421
      %v2433 = vmul.f32 %v2330, %v2421
      %v2434 = vmul.f32 %v2333, %v2421
      %v2435 = vmul.f32 %v2338, %v2421
      %v2436 = vmul.f32 %v2341, %v2421
      %v2437 = vmul.f32 %v2346, %v2421
      %v2438 = vmul.f32 %v2349, %v2421
      %v2439 = vmul.f32 %v2354, %v2421
      %v2440 = vmul.f32 %v2357, %v2421
      %v2441 = vmul.f32 %v2362, %v2421
      %v2442 = vmul.f32 %v2365, %v2421
      %v2443 = vmul.f32 %v2370, %v2421
      %v2444 = vmul.f32 %v2373, %v2421
      %v2445 = vmul.f32 %v2378, %v2421
      %v2446 = vmul.f32 %v2381, %v2421
      %v2447 = vmul.f32 %v2386, %v2421
      %v2448 = vmul.f32 %v2389, %v2421
      %v2449 = vmul.f32 %v2394, %v2421
      %v2450 = vmul.f32 %v2397, %v2421
      %v2451 = vmul.f32 %v2402, %v2421
      %v2452 = vmul.f32 %v2405, %v2421
      %v2453 = vmul.f32 %v2410, %v2421
      %v2454 = vmul.f32 %v2413, %v2421
      %v2455 = vld [vmem:[%s3] sm:$0x1]
      %v2457 = vlaneseq
      %v2458 = vshrl.u32 %v2457, 7
      %v2459 = vsub.s32 0, %v2458
      %v2460 = vrot.slane %v2455, %v2459
      %v2462 = vadd.f32 %v2423, %v2460
      %v2463 = vadd.f32 %v2424, %v2460
      %v2464 = vadd.f32 %v2425, %v2460
      %v2465 = vadd.f32 %v2426, %v2460
      %v2466 = vadd.f32 %v2427, %v2460
      %v2467 = vadd.f32 %v2428, %v2460
      %v2468 = vadd.f32 %v2429, %v2460
      %v2469 = vadd.f32 %v2430, %v2460
      %v2470 = vadd.f32 %v2431, %v2460
      %v2471 = vadd.f32 %v2432, %v2460
      %v2472 = vadd.f32 %v2433, %v2460
      %v2473 = vadd.f32 %v2434, %v2460
      %v2474 = vadd.f32 %v2435, %v2460
      %v2475 = vadd.f32 %v2436, %v2460
      %v2476 = vadd.f32 %v2437, %v2460
      %v2477 = vadd.f32 %v2438, %v2460
      %v2478 = vadd.f32 %v2439, %v2460
      %v2479 = vadd.f32 %v2440, %v2460
      %v2480 = vadd.f32 %v2441, %v2460
      %v2481 = vadd.f32 %v2442, %v2460
      %v2482 = vadd.f32 %v2443, %v2460
      %v2483 = vadd.f32 %v2444, %v2460
      %v2484 = vadd.f32 %v2445, %v2460
      %v2485 = vadd.f32 %v2446, %v2460
      %v2486 = vadd.f32 %v2447, %v2460
      %v2487 = vadd.f32 %v2448, %v2460
      %v2488 = vadd.f32 %v2449, %v2460
      %v2489 = vadd.f32 %v2450, %v2460
      %v2490 = vadd.f32 %v2451, %v2460
      %v2491 = vadd.f32 %v2452, %v2460
      %v2492 = vadd.f32 %v2453, %v2460
      %v2493 = vadd.f32 %v2454, %v2460
      %v2494 = vmax.f32 %v2462, 0.0
      %v2495 = vmax.f32 %v2463, 0.0
      %v2496 = vmax.f32 %v2464, 0.0
      %v2497 = vmax.f32 %v2465, 0.0
      %v2498 = vmax.f32 %v2466, 0.0
      %v2499 = vmax.f32 %v2467, 0.0
      %v2500 = vmax.f32 %v2468, 0.0
      %v2501 = vmax.f32 %v2469, 0.0
      %v2502 = vmax.f32 %v2470, 0.0
      %v2503 = vmax.f32 %v2471, 0.0
      %v2504 = vmax.f32 %v2472, 0.0
      %v2505 = vmax.f32 %v2473, 0.0
      %v2506 = vmax.f32 %v2474, 0.0
      %v2507 = vmax.f32 %v2475, 0.0
      %v2508 = vmax.f32 %v2476, 0.0
      %v2509 = vmax.f32 %v2477, 0.0
      %v2510 = vmax.f32 %v2478, 0.0
      %v2511 = vmax.f32 %v2479, 0.0
      %v2512 = vmax.f32 %v2480, 0.0
      %v2513 = vmax.f32 %v2481, 0.0
      %v2514 = vmax.f32 %v2482, 0.0
      %v2515 = vmax.f32 %v2483, 0.0
      %v2516 = vmax.f32 %v2484, 0.0
      %v2517 = vmax.f32 %v2485, 0.0
      %v2518 = vmax.f32 %v2486, 0.0
      %v2519 = vmax.f32 %v2487, 0.0
      %v2520 = vmax.f32 %v2488, 0.0
      %v2521 = vmax.f32 %v2489, 0.0
      %v2522 = vmax.f32 %v2490, 0.0
      %v2523 = vmax.f32 %v2491, 0.0
      %v2524 = vmax.f32 %v2492, 0.0
      %v2525 = vmax.f32 %v2493, 0.0
      %v2526 = vpack.c.bf16 %v2495, %v2494
      %v2527 = vpack.c.bf16 %v2497, %v2496
      %v2528 = vpack.c.bf16 %v2499, %v2498
      %v2529 = vpack.c.bf16 %v2501, %v2500
      %v2530 = vpack.c.bf16 %v2503, %v2502
      %v2531 = vpack.c.bf16 %v2505, %v2504
      %v2532 = vpack.c.bf16 %v2507, %v2506
      %v2533 = vpack.c.bf16 %v2509, %v2508
      %v2534 = vpack.c.bf16 %v2511, %v2510
      %v2535 = vpack.c.bf16 %v2513, %v2512
      %v2536 = vpack.c.bf16 %v2515, %v2514
      %v2537 = vpack.c.bf16 %v2517, %v2516
      %v2538 = vpack.c.bf16 %v2519, %v2518
      %v2539 = vpack.c.bf16 %v2521, %v2520
      %v2540 = vpack.c.bf16 %v2523, %v2522
      %v2541 = vpack.c.bf16 %v2525, %v2524
      %v2558 = vunpack.c.l.b16 %v2526
      %v2559 = vunpack.c.h.b16 %v2526
      %v2560 = vunpack.c.l.b16 %v2527
      %v2561 = vunpack.c.h.b16 %v2527
      %v2562 = vunpack.c.l.b16 %v2528
      %v2563 = vunpack.c.h.b16 %v2528
      %v2564 = vunpack.c.l.b16 %v2529
      %v2565 = vunpack.c.h.b16 %v2529
      %v2566 = vunpack.c.l.b16 %v2530
      %v2567 = vunpack.c.h.b16 %v2530
      %v2568 = vunpack.c.l.b16 %v2531
      %v2569 = vunpack.c.h.b16 %v2531
      %v2570 = vunpack.c.l.b16 %v2532
      %v2571 = vunpack.c.h.b16 %v2532
      %v2572 = vunpack.c.l.b16 %v2533
      %v2573 = vunpack.c.h.b16 %v2533
      %v2574 = vunpack.c.l.b16 %v2534
      %v2575 = vunpack.c.h.b16 %v2534
      %v2576 = vunpack.c.l.b16 %v2535
      %v2577 = vunpack.c.h.b16 %v2535
      %v2578 = vunpack.c.l.b16 %v2536
      %v2579 = vunpack.c.h.b16 %v2536
      %v2580 = vunpack.c.l.b16 %v2537
      %v2581 = vunpack.c.h.b16 %v2537
      %v2582 = vunpack.c.l.b16 %v2538
      %v2583 = vunpack.c.h.b16 %v2538
      %v2584 = vunpack.c.l.b16 %v2539
      %v2585 = vunpack.c.h.b16 %v2539
      %v2586 = vunpack.c.l.b16 %v2540
      %v2587 = vunpack.c.h.b16 %v2540
      %v2588 = vunpack.c.l.b16 %v2541
      %v2589 = vunpack.c.h.b16 %v2541
      %v2590 = vpack.c.b16 %v2558, %v2558
      %v2591 = vpack.c.b16 %v2559, %v2559
      %v2592 = vpack.c.b16 %v2560, %v2560
      %v2593 = vpack.c.b16 %v2561, %v2561
      %v2594 = vpack.c.b16 %v2562, %v2562
      %v2595 = vpack.c.b16 %v2563, %v2563
      %v2596 = vpack.c.b16 %v2564, %v2564
      %v2597 = vpack.c.b16 %v2565, %v2565
      %v2598 = vpack.c.b16 %v2566, %v2566
      %v2599 = vpack.c.b16 %v2567, %v2567
      %v2600 = vpack.c.b16 %v2568, %v2568
      %v2601 = vpack.c.b16 %v2569, %v2569
      %v2602 = vpack.c.b16 %v2570, %v2570
      %v2603 = vpack.c.b16 %v2571, %v2571
      %v2604 = vpack.c.b16 %v2572, %v2572
      %v2605 = vpack.c.b16 %v2573, %v2573
      %v2606 = vpack.c.b16 %v2574, %v2574
      %v2607 = vpack.c.b16 %v2575, %v2575
      %v2608 = vpack.c.b16 %v2576, %v2576
      %v2609 = vpack.c.b16 %v2577, %v2577
      %v2610 = vpack.c.b16 %v2578, %v2578
      %v2611 = vpack.c.b16 %v2579, %v2579
      %v2612 = vpack.c.b16 %v2580, %v2580
      %v2613 = vpack.c.b16 %v2581, %v2581
      %v2614 = vpack.c.b16 %v2582, %v2582
      %v2615 = vpack.c.b16 %v2583, %v2583
      %v2616 = vpack.c.b16 %v2584, %v2584
      %v2617 = vpack.c.b16 %v2585, %v2585
      %v2618 = vpack.c.b16 %v2586, %v2586
      %v2619 = vpack.c.b16 %v2587, %v2587
      %v2620 = vpack.c.b16 %v2588, %v2588
      %v2621 = vpack.c.b16 %v2589, %v2589
      %2654 = vst [vmem:[%s221] sm:$0xf] %v2590
      %2655 = vst [vmem:[%s221 + $0x4] sm:$0xf] %v2591
      %2656 = vst [vmem:[%s221 + $0x8] sm:$0xf] %v2592
      %2657 = vst [vmem:[%s221 + $0xc] sm:$0xf] %v2593
      %2658 = vst [vmem:[%s221 + $0x10] sm:$0xf] %v2594
      %2659 = vst [vmem:[%s221 + $0x14] sm:$0xf] %v2595
      %2660 = vst [vmem:[%s221 + $0x18] sm:$0xf] %v2596
      %2661 = vst [vmem:[%s221 + $0x1c] sm:$0xf] %v2597
      %2662 = vst [vmem:[%s221 + $0x20] sm:$0xf] %v2598
      %2663 = vst [vmem:[%s221 + $0x24] sm:$0xf] %v2599
      %2664 = vst [vmem:[%s221 + $0x28] sm:$0xf] %v2600
      %2665 = vst [vmem:[%s221 + $0x2c] sm:$0xf] %v2601
      %2666 = vst [vmem:[%s221 + $0x30] sm:$0xf] %v2602
      %2667 = vst [vmem:[%s221 + $0x34] sm:$0xf] %v2603
      %2668 = vst [vmem:[%s221 + $0x38] sm:$0xf] %v2604
      %2669 = vst [vmem:[%s221 + $0x3c] sm:$0xf] %v2605
      %2670 = vst [vmem:[%s221 + $0x40] sm:$0xf] %v2606
      %2671 = vst [vmem:[%s221 + $0x44] sm:$0xf] %v2607
      %2672 = vst [vmem:[%s221 + $0x48] sm:$0xf] %v2608
      %2673 = vst [vmem:[%s221 + $0x4c] sm:$0xf] %v2609
      %2674 = vst [vmem:[%s221 + $0x50] sm:$0xf] %v2610
      %2675 = vst [vmem:[%s221 + $0x54] sm:$0xf] %v2611
      %2676 = vst [vmem:[%s221 + $0x58] sm:$0xf] %v2612
      %2677 = vst [vmem:[%s221 + $0x5c] sm:$0xf] %v2613
      %2678 = vst [vmem:[%s221 + $0x60] sm:$0xf] %v2614
      %2679 = vst [vmem:[%s221 + $0x64] sm:$0xf] %v2615
      %2680 = vst [vmem:[%s221 + $0x68] sm:$0xf] %v2616
      %2681 = vst [vmem:[%s221 + $0x6c] sm:$0xf] %v2617
      %2682 = vst [vmem:[%s221 + $0x70] sm:$0xf] %v2618
      %2683 = vst [vmem:[%s221 + $0x74] sm:$0xf] %v2619
      %2684 = vst [vmem:[%s221 + $0x78] sm:$0xf] %v2620
      %2685 = vst [vmem:[%s221 + $0x7c] sm:$0xf] %v2621
      %s2686 = smul.u32 16, %s20
      %p2687 = scmp.lt.s32.totalorder %s19, 1
      %s2688 = scalar_select %p2687, %s19, 1
      %p2689 = scmp.lt.s32.totalorder %s2686, 15
      %s2690 = scalar_select %p2689, %s2686, 15
      %s2691 = smul.addr %s2690, 2
      %s2692 = smul.addr %s2688, 32
      %s2693 = sadd.s32 %s2691, %s2692
      %s2694 = smul.addr %s2693, 4
      %s2695 = scalar_lea.vmem %s4, %s2694
      // Predicated region
      $region37: #{conv_block_forward.1} parent=35 // pred_check
        %p2696 = pneg %p136
      $region38: #{conv_block_forward.1} parent=35 // pred_check_branch
        %2698 = sbr.rel (%p2696) target = $region40
      $region39: #{conv_block_forward.1} parent=35 // pred_region
        %s2699 = smul.u32 16, %s20
      $region40: #{conv_block_forward.1} parent=35 // pred_fallthru
        _
    $region36: #{conv_block_forward.1} parent=5 // pred_fallthru
      _
    %p2700 = scmp.le.s32.totalorder 2, %s10
    // Predicated region
    $region41: #{conv_block_forward.1} parent=5 // pred_check
      %p2701 = pneg %p2700
    $region42: #{conv_block_forward.1} parent=5 // pred_check_branch
      %2703 = sbr.rel (%p2701) target = $region44
    $region43: #{conv_block_forward.1} parent=5 // pred_region
      %s2704 = ssub.s32 %s10, 2
      // Predicated region
      $region45: #{conv_block_forward.1} parent=43 // pred_check
        %p2705 = pneg %p142
      $region46: #{conv_block_forward.1} parent=43 // pred_check_branch
        %2707 = sbr.rel (%p2705) target = $region48
      $region47: #{conv_block_forward.1} parent=43 // pred_region
        %s2708 = smul.u32 16, %s22
        %p2709 = scmp.lt.s32.totalorder %s21, 1
        %s2710 = scalar_select %p2709, %s21, 1
        %p2711 = scmp.lt.s32.totalorder %s2708, 15
        %s2712 = scalar_select %p2711, %s2708, 15
        %s2713 = smul.addr %s2712, 2
        %s2714 = smul.addr %s2710, 32
        %s2715 = sadd.s32 %s2713, %s2714
        %s2716 = smul.addr %s2715, 4
        %s2717 = scalar_lea.vmem %s4, %s2716
      $region48: #{conv_block_forward.1} parent=43 // pred_fallthru
        _
    $region44: #{conv_block_forward.1} parent=5 // pred_fallthru
      _
  $region6: #{conv_block_forward.1} parent=0 // loop_footer
    %s14 = sadd.s32 1, %s10
  $region7: #{conv_block_forward.1} parent=0 // loop_footer_branch
    %9 = sbr.rel target = $region3
  $region8: #{conv_block_forward.1} parent=0 // loop_exit
    _

</llo_original>
